<compile_context>
chip_gen: v6e
topology: v6e:2x2x1
jax: 0.10.0
libtpu: 0.0.40
codegen_flags: <defaults>
</compile_context>

<pallas_src>
import numpy as np
import jax
import jax.numpy as jnp
from jax.experimental import pallas as pl
from jax.experimental.pallas import tpu as pltpu

INPUT_JOINTS = 16
INPUT_SIZE = INPUT_JOINTS * 3          # 48  (module doc: n x 16 x 3)
NOISE_CHANNLE = 45
RAW_IN = INPUT_SIZE + NOISE_CHANNLE    # 93
PADDED_IN = 128                        # pad features to one lane width (zero-padded -> identical math)
LINEAR_SIZE = 256
NUM_STAGE = 2
NUM_INNER = 2 * NUM_STAGE              # 4 (Linear, BN, LeakyReLU) blocks after the input layer
BN_EPS = 1e-5
LRELU_SLOPE = 0.01                     # nn.LeakyReLU default


# ----------------------------- Pallas kernel ---------------------------------

def _bn_lrelu(y, gamma, beta):
    # BatchNorm1d in training mode (fresh module default): batch statistics,
    # biased variance, eps=1e-5; single-pass moments; then LeakyReLU(0.01).
    m1 = jnp.mean(y, axis=0, keepdims=True)
    m2 = jnp.mean(y * y, axis=0, keepdims=True)
    var = jnp.maximum(m2 - m1 * m1, 0.0)
    y = (y - m1) * jax.lax.rsqrt(var + BN_EPS)
    y = y * gamma + beta
    return jnp.where(y > 0, y, LRELU_SLOPE * y)


def _mlp_kernel(xn_ref, w0_ref, g0_ref, bt0_ref, ws_ref, gs_ref, bts_ref, feat_ref):
    # One grid step == one branch (0 = R, 1 = T).
    # xn: (1, N, 128) bf16; w0: (1, 128, 256) bf16; ws: (1, 4, 256, 256) bf16.
    # Linear biases are omitted: they cancel exactly under training-mode BN.
    y = jnp.dot(xn_ref[0], w0_ref[0], preferred_element_type=jnp.float32)   # fp32 accum
    y = _bn_lrelu(y, g0_ref[0], bt0_ref[0])
    for i in range(NUM_INNER):                                              # static unroll
        y = jnp.dot(y.astype(jnp.bfloat16), ws_ref[0, i],
                    preferred_element_type=jnp.float32)
        y = _bn_lrelu(y, gs_ref[0, i], bts_ref[0, i])
    feat_ref[0] = y                                                         # (N, 256) lane-dense store


def run_mlp_fused(xn2, bp):
    # xn2: (2, N, PADDED_IN) bf16 — branch-stacked (x, noise) inputs.
    n = xn2.shape[1]
    flops = 2 * 2 * (n * PADDED_IN * LINEAR_SIZE
                     + NUM_INNER * n * LINEAR_SIZE * LINEAR_SIZE)
    bytes_accessed = (xn2.size * 2
                      + (bp["w0"].size + bp["ws"].size) * 2
                      + (bp["g0"].size + bp["bt0"].size + bp["gs"].size + bp["bts"].size) * 4
                      + 2 * n * LINEAR_SIZE * 4)
    feat = pl.pallas_call(
        _mlp_kernel,
        out_shape=jax.ShapeDtypeStruct((2, n, LINEAR_SIZE), jnp.float32),
        grid=(2,),
        in_specs=[
            pl.BlockSpec((1, n, PADDED_IN), lambda b: (b, 0, 0)),
            pl.BlockSpec((1, PADDED_IN, LINEAR_SIZE), lambda b: (b, 0, 0)),
            pl.BlockSpec((1, 1, LINEAR_SIZE), lambda b: (b, 0, 0)),
            pl.BlockSpec((1, 1, LINEAR_SIZE), lambda b: (b, 0, 0)),
            pl.BlockSpec((1, NUM_INNER, LINEAR_SIZE, LINEAR_SIZE), lambda b: (b, 0, 0, 0)),
            pl.BlockSpec((1, NUM_INNER, 1, LINEAR_SIZE), lambda b: (b, 0, 0, 0)),
            pl.BlockSpec((1, NUM_INNER, 1, LINEAR_SIZE), lambda b: (b, 0, 0, 0)),
        ],
        out_specs=pl.BlockSpec((1, n, LINEAR_SIZE), lambda b: (b, 0, 0)),
        compiler_params=pltpu.CompilerParams(
            dimension_semantics=("parallel",)),      # v7x: branch per TensorCore (hint)
        cost_estimate=pl.CostEstimate(
            flops=flops,
            transcendentals=2 * (1 + NUM_INNER) * LINEAR_SIZE,
            bytes_accessed=bytes_accessed),
    )(xn2, bp["w0"], bp["g0"], bp["bt0"], bp["ws"], bp["gs"], bp["bts"])
    return feat


# ------------------------------ JAX glue --------------------------------------

def axis_angle_to_matrix(aa):
    # Rodrigues formula; equivalent to pytorch3d.transforms.axis_angle_to_matrix.
    angle = jnp.linalg.norm(aa, axis=-1, keepdims=True)          # (n, 1)
    safe = jnp.where(angle < 1e-8, 1.0, angle)
    u = aa / safe
    ux, uy, uz = u[:, 0], u[:, 1], u[:, 2]
    a = angle[:, 0]
    c, s = jnp.cos(a), jnp.sin(a)
    C = 1.0 - c
    R = jnp.stack([
        jnp.stack([c + ux * ux * C, ux * uy * C - uz * s, ux * uz * C + uy * s], -1),
        jnp.stack([uy * ux * C + uz * s, c + uy * uy * C, uy * uz * C - ux * s], -1),
        jnp.stack([uz * ux * C - uy * s, uz * uy * C + ux * s, c + uz * uz * C], -1),
    ], axis=-2)                                                  # (n, 3, 3)
    eye = jnp.broadcast_to(jnp.eye(3, dtype=aa.dtype), R.shape)
    return jnp.where(angle[:, :, None] < 1e-8, eye, R)


def apply_rt(augx, rM, t3):
    # Plain JAX (XLA-fused): ~7 KiB / ~1.7 KFLOP — a dedicated kernel launch here
    # was pure dispatch overhead.
    c = augx - augx[:, :, :1, :]                                 # root-center per frame
    augx_r = jnp.einsum('nab,npjb->npja', rM, c)                 # rotate
    return augx_r + t3[:, None, None, :]                         # translate


def _linear_init(key, fan_in, fan_out):
    kw, kb = jax.random.split(key)
    bound = 1.0 / np.sqrt(fan_in)
    w = jax.random.uniform(kw, (fan_in, fan_out), jnp.float32, -bound, bound)
    b = jax.random.uniform(kb, (1, fan_out), jnp.float32, -bound, bound)
    return w, b


def _branch_params(key):
    keys = jax.random.split(key, 1 + NUM_INNER)
    w0, b0 = _linear_init(keys[0], RAW_IN, LINEAR_SIZE)
    w0p = jnp.zeros((PADDED_IN, LINEAR_SIZE), jnp.float32).at[:RAW_IN].set(w0)
    ws, bs = [], []
    for i in range(NUM_INNER):
        w, b = _linear_init(keys[1 + i], LINEAR_SIZE, LINEAR_SIZE)
        ws.append(w)
        bs.append(b)
    return {
        "w0": w0p.astype(jnp.bfloat16),                     # bf16 weights, fp32 accum in-kernel
        "b0": b0,                                           # kept for fidelity; cancels under training BN
        "g0": jnp.ones((1, LINEAR_SIZE), jnp.float32),
        "bt0": jnp.zeros((1, LINEAR_SIZE), jnp.float32),
        "ws": jnp.stack(ws).astype(jnp.bfloat16),
        "bs": jnp.stack(bs),                                # kept for fidelity; cancels under training BN
        "gs": jnp.ones((NUM_INNER, 1, LINEAR_SIZE), jnp.float32),
        "bts": jnp.zeros((NUM_INNER, 1, LINEAR_SIZE), jnp.float32),
    }


def init_params(key):
    kr, kt, k2r, k2t = jax.random.split(key, 4)
    R = _branch_params(kr)
    T = _branch_params(kt)
    branches = {k: jnp.stack([R[k], T[k]]) for k in R}       # leading axis 2 = (R, T)
    w2_R, b2_R = _linear_init(k2r, LINEAR_SIZE, 7)           # defined but unused in forward (matches reference)
    w2_T, b2_T = _linear_init(k2t, LINEAR_SIZE, 3)
    return {"branches": branches, "w2_R": w2_R, "b2_R": b2_R,
            "w2_T": w2_T, "b2_T": b2_T}


def rt_generator_forward(params, inputs_3d, augx, key):
    # inputs_3d: (n, K, pad, J, 3); augx: (n, pad, J, 3)
    n = inputs_3d.shape[0]
    inp = inputs_3d[:, 0].astype(jnp.float32)        # (n, pad, J, 3)
    pad = inp.shape[1]
    middle = (pad - 1) // 2
    frame = inp[:, middle]                           # (n, J, 3)
    x = (frame - frame[:, :1, :]).reshape(n, -1)     # (n, INPUT_SIZE)

    k_r, k_t, k_axis = jax.random.split(key, 3)
    # TODO(synk): torch.randn / torch.normal RNG streams are not reproducible in JAX;
    # deterministic jax.random noise is used instead (same distribution & shapes).
    noise_r = jax.random.normal(k_r, (n, NOISE_CHANNLE), jnp.float32)
    noise_t = jax.random.normal(k_t, (n, NOISE_CHANNLE), jnp.float32)
    xn2 = jnp.stack([jnp.concatenate([x, noise_r], axis=-1),
                     jnp.concatenate([x, noise_t], axis=-1)])        # (2, n, 93)
    xn2 = jnp.pad(xn2, ((0, 0), (0, 0), (0, PADDED_IN - RAW_IN)))    # zero-pad -> identical math
    xn2 = xn2.astype(jnp.bfloat16)                                   # bf16 input DMA

    feat = run_mlp_fused(xn2, params["branches"])    # (2, n, 256) fp32
    r = feat[0]                                      # R-branch features

    # T head (256 -> 3) + z-squaring: tiny, left to XLA (feat[1] is lane-dense in HBM already).
    t_head = jnp.dot(feat[1], params["w2_T"]) + params["b2_T"][0]
    t3 = t_head.at[:, 2].set(t_head[:, 2] * t_head[:, 2])           # t[:,2] = t[:,2]^2

    r_mean = r[:, :3]
    r_std = r[:, 3:6] * r[:, 3:6]
    r_axis = r_mean + r_std * jax.random.normal(k_axis, (n, 3), jnp.float32)
    norm = jnp.linalg.norm(r_axis, axis=-1, keepdims=True)
    r_axis = r_axis / jnp.maximum(norm, 1e-12)       # guard only active in the degenerate (NaN-in-reference) case
    r_axis = r_axis * r[:, 6:7]
    rM = axis_angle_to_matrix(r_axis)                # (n, 3, 3)

    augx_rt = apply_rt(augx.astype(jnp.float32), rM, t3)
    t_out = jnp.broadcast_to(t3[:, None, None, :], (n, pad, 1, 3))
    return augx_rt, (r, t_out)


# --------------------------------- main ---------------------------------------

if __name__ == "__main__":
    key = jax.random.PRNGKey(0)
    kp, kx, ka, kf = jax.random.split(key, 4)
    params = init_params(kp)

    n, K, pad, J = 4, 2, 9, INPUT_JOINTS
    inputs_3d = jax.random.normal(kx, (n, K, pad, J, 3), jnp.float32)
    augx = jax.random.normal(ka, (n, pad, J, 3), jnp.float32)

    fwd = jax.jit(rt_generator_forward)
    augx_rt, (r, t) = fwd(params, inputs_3d, augx, kf)
    jax.block_until_ready((augx_rt, r, t))

    assert augx_rt.shape == (n, pad, J, 3)
    assert r.shape == (n, LINEAR_SIZE)
    assert t.shape == (n, pad, 1, 3)
    assert bool(jnp.all(jnp.isfinite(augx_rt)))
    assert bool(jnp.all(jnp.isfinite(r)))
    assert bool(jnp.all(jnp.isfinite(t)))
    print("KERNEL_OK")
</pallas_src>

<mosaic_0001>
module attributes {stable_mosaic.version = 11 : i64} {
  func.func @_mlp_kernel(%arg0: i32, %arg1: memref<1x4x128xbf16, #tpu.memory_space<vmem>>, %arg2: memref<1x128x256xbf16, #tpu.memory_space<vmem>>, %arg3: memref<1x1x256xf32, #tpu.memory_space<vmem>>, %arg4: memref<1x1x256xf32, #tpu.memory_space<vmem>>, %arg5: memref<1x4x256x256xbf16, #tpu.memory_space<vmem>>, %arg6: memref<1x4x1x256xf32, #tpu.memory_space<vmem>>, %arg7: memref<1x4x1x256xf32, #tpu.memory_space<vmem>>, %arg8: memref<1x4x256xf32, #tpu.memory_space<vmem>>) attributes {dimension_semantics = [#tpu.dimension_semantics<parallel>], iteration_bounds = array<i64: 2>, scalar_prefetch = 0 : i64, scratch_operands = 0 : i64, tpu.core_type = #tpu.core_type<tc>, window_params = [{transform_indices = @transform_0, window_bounds = array<i64: 1, 4, 128>}, {transform_indices = @transform_1, window_bounds = array<i64: 1, 128, 256>}, {transform_indices = @transform_2, window_bounds = array<i64: 1, 1, 256>}, {transform_indices = @transform_3, window_bounds = array<i64: 1, 1, 256>}, {transform_indices = @transform_4, window_bounds = array<i64: 1, 4, 256, 256>}, {transform_indices = @transform_5, window_bounds = array<i64: 1, 4, 1, 256>}, {transform_indices = @transform_6, window_bounds = array<i64: 1, 4, 1, 256>}, {transform_indices = @transform_7, window_bounds = array<i64: 1, 4, 256>}]} {
    %c0 = arith.constant 0 : index
    %c0_0 = arith.constant 0 : index
    %c0_1 = arith.constant 0 : index
    %0 = vector.load %arg1[%c0, %c0_0, %c0_1] : memref<1x4x128xbf16, #tpu.memory_space<vmem>>, vector<1x4x128xbf16>
    %1 = vector.shape_cast %0 : vector<1x4x128xbf16> to vector<4x128xbf16>
    %c0_2 = arith.constant 0 : index
    %c0_3 = arith.constant 0 : index
    %c0_4 = arith.constant 0 : index
    %2 = vector.load %arg2[%c0_2, %c0_3, %c0_4] : memref<1x128x256xbf16, #tpu.memory_space<vmem>>, vector<1x128x256xbf16>
    %3 = vector.shape_cast %2 : vector<1x128x256xbf16> to vector<128x256xbf16>
    %cst = arith.constant dense<0.000000e+00> : vector<4x256xf32>
    %4 = tpu.matmul %1, %3, %cst {dimension_numbers = #tpu.dot_dimension_numbers<[1], [0], [0], [1], [0, 0, 1, 1], [], []>} : vector<4x128xbf16>, vector<128x256xbf16>, vector<4x256xf32> -> vector<4x256xf32>
    %c0_5 = arith.constant 0 : index
    %c0_6 = arith.constant 0 : index
    %c0_7 = arith.constant 0 : index
    %5 = vector.load %arg3[%c0_5, %c0_6, %c0_7] : memref<1x1x256xf32, #tpu.memory_space<vmem>>, vector<1x1x256xf32>
    %6 = vector.shape_cast %5 : vector<1x1x256xf32> to vector<1x256xf32>
    %c0_8 = arith.constant 0 : index
    %c0_9 = arith.constant 0 : index
    %c0_10 = arith.constant 0 : index
    %7 = vector.load %arg4[%c0_8, %c0_9, %c0_10] : memref<1x1x256xf32, #tpu.memory_space<vmem>>, vector<1x1x256xf32>
    %8 = vector.shape_cast %7 : vector<1x1x256xf32> to vector<1x256xf32>
    %cst_11 = arith.constant dense<0.000000e+00> : vector<256xf32>
    %9 = vector.multi_reduction <add>, %4, %cst_11 [0] : vector<4x256xf32> to vector<256xf32>
    %10 = vector.shape_cast %9 : vector<256xf32> to vector<1x256xf32>
    %cst_12 = arith.constant 4.000000e+00 : f32
    %11 = vector.broadcast %cst_12 : f32 to vector<1x256xf32>
    %12 = arith.divf %10, %11 : vector<1x256xf32>
    %13 = arith.mulf %4, %4 : vector<4x256xf32>
    %cst_13 = arith.constant dense<0.000000e+00> : vector<256xf32>
    %14 = vector.multi_reduction <add>, %13, %cst_13 [0] : vector<4x256xf32> to vector<256xf32>
    %15 = vector.shape_cast %14 : vector<256xf32> to vector<1x256xf32>
    %cst_14 = arith.constant 4.000000e+00 : f32
    %16 = vector.broadcast %cst_14 : f32 to vector<1x256xf32>
    %17 = arith.divf %15, %16 : vector<1x256xf32>
    %18 = arith.mulf %12, %12 : vector<1x256xf32>
    %19 = arith.subf %17, %18 : vector<1x256xf32>
    %cst_15 = arith.constant 0.000000e+00 : f32
    %20 = vector.broadcast %cst_15 : f32 to vector<1x256xf32>
    %21 = arith.maximumf %19, %20 : vector<1x256xf32>
    %22 = vector.broadcast %12 : vector<1x256xf32> to vector<4x256xf32>
    %23 = arith.subf %4, %22 : vector<4x256xf32>
    %cst_16 = arith.constant 9.99999974E-6 : f32
    %24 = vector.broadcast %cst_16 : f32 to vector<1x256xf32>
    %25 = arith.addf %21, %24 : vector<1x256xf32>
    %26 = math.rsqrt %25 : vector<1x256xf32>
    %27 = vector.broadcast %26 : vector<1x256xf32> to vector<4x256xf32>
    %28 = arith.mulf %23, %27 : vector<4x256xf32>
    %29 = vector.broadcast %6 : vector<1x256xf32> to vector<4x256xf32>
    %30 = arith.mulf %28, %29 : vector<4x256xf32>
    %31 = vector.broadcast %8 : vector<1x256xf32> to vector<4x256xf32>
    %32 = arith.addf %30, %31 : vector<4x256xf32>
    %cst_17 = arith.constant 0.000000e+00 : f32
    %33 = vector.broadcast %cst_17 : f32 to vector<4x256xf32>
    %34 = arith.cmpf ogt, %32, %33 : vector<4x256xf32>
    %cst_18 = arith.constant 0.00999999977 : f32
    %35 = vector.broadcast %cst_18 : f32 to vector<4x256xf32>
    %36 = arith.mulf %35, %32 : vector<4x256xf32>
    %37 = arith.select %34, %32, %36 : vector<4x256xi1>, vector<4x256xf32>
    %38 = arith.truncf %37 : vector<4x256xf32> to vector<4x256xbf16>
    %c0_19 = arith.constant 0 : index
    %c0_20 = arith.constant 0 : index
    %c0_21 = arith.constant 0 : index
    %c0_22 = arith.constant 0 : index
    %39 = vector.load %arg5[%c0_19, %c0_20, %c0_21, %c0_22] : memref<1x4x256x256xbf16, #tpu.memory_space<vmem>>, vector<1x1x256x256xbf16>
    %40 = vector.shape_cast %39 : vector<1x1x256x256xbf16> to vector<256x256xbf16>
    %cst_23 = arith.constant dense<0.000000e+00> : vector<4x256xf32>
    %41 = tpu.matmul %38, %40, %cst_23 {dimension_numbers = #tpu.dot_dimension_numbers<[1], [0], [0], [1], [0, 0, 1, 1], [], []>} : vector<4x256xbf16>, vector<256x256xbf16>, vector<4x256xf32> -> vector<4x256xf32>
    %c0_24 = arith.constant 0 : index
    %c0_25 = arith.constant 0 : index
    %c0_26 = arith.constant 0 : index
    %c0_27 = arith.constant 0 : index
    %42 = vector.load %arg6[%c0_24, %c0_25, %c0_26, %c0_27] : memref<1x4x1x256xf32, #tpu.memory_space<vmem>>, vector<1x1x1x256xf32>
    %43 = vector.shape_cast %42 : vector<1x1x1x256xf32> to vector<1x256xf32>
    %c0_28 = arith.constant 0 : index
    %c0_29 = arith.constant 0 : index
    %c0_30 = arith.constant 0 : index
    %c0_31 = arith.constant 0 : index
    %44 = vector.load %arg7[%c0_28, %c0_29, %c0_30, %c0_31] : memref<1x4x1x256xf32, #tpu.memory_space<vmem>>, vector<1x1x1x256xf32>
    %45 = vector.shape_cast %44 : vector<1x1x1x256xf32> to vector<1x256xf32>
    %cst_32 = arith.constant dense<0.000000e+00> : vector<256xf32>
    %46 = vector.multi_reduction <add>, %41, %cst_32 [0] : vector<4x256xf32> to vector<256xf32>
    %47 = vector.shape_cast %46 : vector<256xf32> to vector<1x256xf32>
    %cst_33 = arith.constant 4.000000e+00 : f32
    %48 = vector.broadcast %cst_33 : f32 to vector<1x256xf32>
    %49 = arith.divf %47, %48 : vector<1x256xf32>
    %50 = arith.mulf %41, %41 : vector<4x256xf32>
    %cst_34 = arith.constant dense<0.000000e+00> : vector<256xf32>
    %51 = vector.multi_reduction <add>, %50, %cst_34 [0] : vector<4x256xf32> to vector<256xf32>
    %52 = vector.shape_cast %51 : vector<256xf32> to vector<1x256xf32>
    %cst_35 = arith.constant 4.000000e+00 : f32
    %53 = vector.broadcast %cst_35 : f32 to vector<1x256xf32>
    %54 = arith.divf %52, %53 : vector<1x256xf32>
    %55 = arith.mulf %49, %49 : vector<1x256xf32>
    %56 = arith.subf %54, %55 : vector<1x256xf32>
    %cst_36 = arith.constant 0.000000e+00 : f32
    %57 = vector.broadcast %cst_36 : f32 to vector<1x256xf32>
    %58 = arith.maximumf %56, %57 : vector<1x256xf32>
    %59 = vector.broadcast %49 : vector<1x256xf32> to vector<4x256xf32>
    %60 = arith.subf %41, %59 : vector<4x256xf32>
    %cst_37 = arith.constant 9.99999974E-6 : f32
    %61 = vector.broadcast %cst_37 : f32 to vector<1x256xf32>
    %62 = arith.addf %58, %61 : vector<1x256xf32>
    %63 = math.rsqrt %62 : vector<1x256xf32>
    %64 = vector.broadcast %63 : vector<1x256xf32> to vector<4x256xf32>
    %65 = arith.mulf %60, %64 : vector<4x256xf32>
    %66 = vector.broadcast %43 : vector<1x256xf32> to vector<4x256xf32>
    %67 = arith.mulf %65, %66 : vector<4x256xf32>
    %68 = vector.broadcast %45 : vector<1x256xf32> to vector<4x256xf32>
    %69 = arith.addf %67, %68 : vector<4x256xf32>
    %cst_38 = arith.constant 0.000000e+00 : f32
    %70 = vector.broadcast %cst_38 : f32 to vector<4x256xf32>
    %71 = arith.cmpf ogt, %69, %70 : vector<4x256xf32>
    %cst_39 = arith.constant 0.00999999977 : f32
    %72 = vector.broadcast %cst_39 : f32 to vector<4x256xf32>
    %73 = arith.mulf %72, %69 : vector<4x256xf32>
    %74 = arith.select %71, %69, %73 : vector<4x256xi1>, vector<4x256xf32>
    %75 = arith.truncf %74 : vector<4x256xf32> to vector<4x256xbf16>
    %c0_40 = arith.constant 0 : index
    %c1 = arith.constant 1 : index
    %c0_41 = arith.constant 0 : index
    %c0_42 = arith.constant 0 : index
    %76 = vector.load %arg5[%c0_40, %c1, %c0_41, %c0_42] : memref<1x4x256x256xbf16, #tpu.memory_space<vmem>>, vector<1x1x256x256xbf16>
    %77 = vector.shape_cast %76 : vector<1x1x256x256xbf16> to vector<256x256xbf16>
    %cst_43 = arith.constant dense<0.000000e+00> : vector<4x256xf32>
    %78 = tpu.matmul %75, %77, %cst_43 {dimension_numbers = #tpu.dot_dimension_numbers<[1], [0], [0], [1], [0, 0, 1, 1], [], []>} : vector<4x256xbf16>, vector<256x256xbf16>, vector<4x256xf32> -> vector<4x256xf32>
    %c0_44 = arith.constant 0 : index
    %c1_45 = arith.constant 1 : index
    %c0_46 = arith.constant 0 : index
    %c0_47 = arith.constant 0 : index
    %79 = vector.load %arg6[%c0_44, %c1_45, %c0_46, %c0_47] : memref<1x4x1x256xf32, #tpu.memory_space<vmem>>, vector<1x1x1x256xf32>
    %80 = vector.shape_cast %79 : vector<1x1x1x256xf32> to vector<1x256xf32>
    %c0_48 = arith.constant 0 : index
    %c1_49 = arith.constant 1 : index
    %c0_50 = arith.constant 0 : index
    %c0_51 = arith.constant 0 : index
    %81 = vector.load %arg7[%c0_48, %c1_49, %c0_50, %c0_51] : memref<1x4x1x256xf32, #tpu.memory_space<vmem>>, vector<1x1x1x256xf32>
    %82 = vector.shape_cast %81 : vector<1x1x1x256xf32> to vector<1x256xf32>
    %cst_52 = arith.constant dense<0.000000e+00> : vector<256xf32>
    %83 = vector.multi_reduction <add>, %78, %cst_52 [0] : vector<4x256xf32> to vector<256xf32>
    %84 = vector.shape_cast %83 : vector<256xf32> to vector<1x256xf32>
    %cst_53 = arith.constant 4.000000e+00 : f32
    %85 = vector.broadcast %cst_53 : f32 to vector<1x256xf32>
    %86 = arith.divf %84, %85 : vector<1x256xf32>
    %87 = arith.mulf %78, %78 : vector<4x256xf32>
    %cst_54 = arith.constant dense<0.000000e+00> : vector<256xf32>
    %88 = vector.multi_reduction <add>, %87, %cst_54 [0] : vector<4x256xf32> to vector<256xf32>
    %89 = vector.shape_cast %88 : vector<256xf32> to vector<1x256xf32>
    %cst_55 = arith.constant 4.000000e+00 : f32
    %90 = vector.broadcast %cst_55 : f32 to vector<1x256xf32>
    %91 = arith.divf %89, %90 : vector<1x256xf32>
    %92 = arith.mulf %86, %86 : vector<1x256xf32>
    %93 = arith.subf %91, %92 : vector<1x256xf32>
    %cst_56 = arith.constant 0.000000e+00 : f32
    %94 = vector.broadcast %cst_56 : f32 to vector<1x256xf32>
    %95 = arith.maximumf %93, %94 : vector<1x256xf32>
    %96 = vector.broadcast %86 : vector<1x256xf32> to vector<4x256xf32>
    %97 = arith.subf %78, %96 : vector<4x256xf32>
    %cst_57 = arith.constant 9.99999974E-6 : f32
    %98 = vector.broadcast %cst_57 : f32 to vector<1x256xf32>
    %99 = arith.addf %95, %98 : vector<1x256xf32>
    %100 = math.rsqrt %99 : vector<1x256xf32>
    %101 = vector.broadcast %100 : vector<1x256xf32> to vector<4x256xf32>
    %102 = arith.mulf %97, %101 : vector<4x256xf32>
    %103 = vector.broadcast %80 : vector<1x256xf32> to vector<4x256xf32>
    %104 = arith.mulf %102, %103 : vector<4x256xf32>
    %105 = vector.broadcast %82 : vector<1x256xf32> to vector<4x256xf32>
    %106 = arith.addf %104, %105 : vector<4x256xf32>
    %cst_58 = arith.constant 0.000000e+00 : f32
    %107 = vector.broadcast %cst_58 : f32 to vector<4x256xf32>
    %108 = arith.cmpf ogt, %106, %107 : vector<4x256xf32>
    %cst_59 = arith.constant 0.00999999977 : f32
    %109 = vector.broadcast %cst_59 : f32 to vector<4x256xf32>
    %110 = arith.mulf %109, %106 : vector<4x256xf32>
    %111 = arith.select %108, %106, %110 : vector<4x256xi1>, vector<4x256xf32>
    %112 = arith.truncf %111 : vector<4x256xf32> to vector<4x256xbf16>
    %c0_60 = arith.constant 0 : index
    %c2 = arith.constant 2 : index
    %c0_61 = arith.constant 0 : index
    %c0_62 = arith.constant 0 : index
    %113 = vector.load %arg5[%c0_60, %c2, %c0_61, %c0_62] : memref<1x4x256x256xbf16, #tpu.memory_space<vmem>>, vector<1x1x256x256xbf16>
    %114 = vector.shape_cast %113 : vector<1x1x256x256xbf16> to vector<256x256xbf16>
    %cst_63 = arith.constant dense<0.000000e+00> : vector<4x256xf32>
    %115 = tpu.matmul %112, %114, %cst_63 {dimension_numbers = #tpu.dot_dimension_numbers<[1], [0], [0], [1], [0, 0, 1, 1], [], []>} : vector<4x256xbf16>, vector<256x256xbf16>, vector<4x256xf32> -> vector<4x256xf32>
    %c0_64 = arith.constant 0 : index
    %c2_65 = arith.constant 2 : index
    %c0_66 = arith.constant 0 : index
    %c0_67 = arith.constant 0 : index
    %116 = vector.load %arg6[%c0_64, %c2_65, %c0_66, %c0_67] : memref<1x4x1x256xf32, #tpu.memory_space<vmem>>, vector<1x1x1x256xf32>
    %117 = vector.shape_cast %116 : vector<1x1x1x256xf32> to vector<1x256xf32>
    %c0_68 = arith.constant 0 : index
    %c2_69 = arith.constant 2 : index
    %c0_70 = arith.constant 0 : index
    %c0_71 = arith.constant 0 : index
    %118 = vector.load %arg7[%c0_68, %c2_69, %c0_70, %c0_71] : memref<1x4x1x256xf32, #tpu.memory_space<vmem>>, vector<1x1x1x256xf32>
    %119 = vector.shape_cast %118 : vector<1x1x1x256xf32> to vector<1x256xf32>
    %cst_72 = arith.constant dense<0.000000e+00> : vector<256xf32>
    %120 = vector.multi_reduction <add>, %115, %cst_72 [0] : vector<4x256xf32> to vector<256xf32>
    %121 = vector.shape_cast %120 : vector<256xf32> to vector<1x256xf32>
    %cst_73 = arith.constant 4.000000e+00 : f32
    %122 = vector.broadcast %cst_73 : f32 to vector<1x256xf32>
    %123 = arith.divf %121, %122 : vector<1x256xf32>
    %124 = arith.mulf %115, %115 : vector<4x256xf32>
    %cst_74 = arith.constant dense<0.000000e+00> : vector<256xf32>
    %125 = vector.multi_reduction <add>, %124, %cst_74 [0] : vector<4x256xf32> to vector<256xf32>
    %126 = vector.shape_cast %125 : vector<256xf32> to vector<1x256xf32>
    %cst_75 = arith.constant 4.000000e+00 : f32
    %127 = vector.broadcast %cst_75 : f32 to vector<1x256xf32>
    %128 = arith.divf %126, %127 : vector<1x256xf32>
    %129 = arith.mulf %123, %123 : vector<1x256xf32>
    %130 = arith.subf %128, %129 : vector<1x256xf32>
    %cst_76 = arith.constant 0.000000e+00 : f32
    %131 = vector.broadcast %cst_76 : f32 to vector<1x256xf32>
    %132 = arith.maximumf %130, %131 : vector<1x256xf32>
    %133 = vector.broadcast %123 : vector<1x256xf32> to vector<4x256xf32>
    %134 = arith.subf %115, %133 : vector<4x256xf32>
    %cst_77 = arith.constant 9.99999974E-6 : f32
    %135 = vector.broadcast %cst_77 : f32 to vector<1x256xf32>
    %136 = arith.addf %132, %135 : vector<1x256xf32>
    %137 = math.rsqrt %136 : vector<1x256xf32>
    %138 = vector.broadcast %137 : vector<1x256xf32> to vector<4x256xf32>
    %139 = arith.mulf %134, %138 : vector<4x256xf32>
    %140 = vector.broadcast %117 : vector<1x256xf32> to vector<4x256xf32>
    %141 = arith.mulf %139, %140 : vector<4x256xf32>
    %142 = vector.broadcast %119 : vector<1x256xf32> to vector<4x256xf32>
    %143 = arith.addf %141, %142 : vector<4x256xf32>
    %cst_78 = arith.constant 0.000000e+00 : f32
    %144 = vector.broadcast %cst_78 : f32 to vector<4x256xf32>
    %145 = arith.cmpf ogt, %143, %144 : vector<4x256xf32>
    %cst_79 = arith.constant 0.00999999977 : f32
    %146 = vector.broadcast %cst_79 : f32 to vector<4x256xf32>
    %147 = arith.mulf %146, %143 : vector<4x256xf32>
    %148 = arith.select %145, %143, %147 : vector<4x256xi1>, vector<4x256xf32>
    %149 = arith.truncf %148 : vector<4x256xf32> to vector<4x256xbf16>
    %c0_80 = arith.constant 0 : index
    %c3 = arith.constant 3 : index
    %c0_81 = arith.constant 0 : index
    %c0_82 = arith.constant 0 : index
    %150 = vector.load %arg5[%c0_80, %c3, %c0_81, %c0_82] : memref<1x4x256x256xbf16, #tpu.memory_space<vmem>>, vector<1x1x256x256xbf16>
    %151 = vector.shape_cast %150 : vector<1x1x256x256xbf16> to vector<256x256xbf16>
    %cst_83 = arith.constant dense<0.000000e+00> : vector<4x256xf32>
    %152 = tpu.matmul %149, %151, %cst_83 {dimension_numbers = #tpu.dot_dimension_numbers<[1], [0], [0], [1], [0, 0, 1, 1], [], []>} : vector<4x256xbf16>, vector<256x256xbf16>, vector<4x256xf32> -> vector<4x256xf32>
    %c0_84 = arith.constant 0 : index
    %c3_85 = arith.constant 3 : index
    %c0_86 = arith.constant 0 : index
    %c0_87 = arith.constant 0 : index
    %153 = vector.load %arg6[%c0_84, %c3_85, %c0_86, %c0_87] : memref<1x4x1x256xf32, #tpu.memory_space<vmem>>, vector<1x1x1x256xf32>
    %154 = vector.shape_cast %153 : vector<1x1x1x256xf32> to vector<1x256xf32>
    %c0_88 = arith.constant 0 : index
    %c3_89 = arith.constant 3 : index
    %c0_90 = arith.constant 0 : index
    %c0_91 = arith.constant 0 : index
    %155 = vector.load %arg7[%c0_88, %c3_89, %c0_90, %c0_91] : memref<1x4x1x256xf32, #tpu.memory_space<vmem>>, vector<1x1x1x256xf32>
    %156 = vector.shape_cast %155 : vector<1x1x1x256xf32> to vector<1x256xf32>
    %cst_92 = arith.constant dense<0.000000e+00> : vector<256xf32>
    %157 = vector.multi_reduction <add>, %152, %cst_92 [0] : vector<4x256xf32> to vector<256xf32>
    %158 = vector.shape_cast %157 : vector<256xf32> to vector<1x256xf32>
    %cst_93 = arith.constant 4.000000e+00 : f32
    %159 = vector.broadcast %cst_93 : f32 to vector<1x256xf32>
    %160 = arith.divf %158, %159 : vector<1x256xf32>
    %161 = arith.mulf %152, %152 : vector<4x256xf32>
    %cst_94 = arith.constant dense<0.000000e+00> : vector<256xf32>
    %162 = vector.multi_reduction <add>, %161, %cst_94 [0] : vector<4x256xf32> to vector<256xf32>
    %163 = vector.shape_cast %162 : vector<256xf32> to vector<1x256xf32>
    %cst_95 = arith.constant 4.000000e+00 : f32
    %164 = vector.broadcast %cst_95 : f32 to vector<1x256xf32>
    %165 = arith.divf %163, %164 : vector<1x256xf32>
    %166 = arith.mulf %160, %160 : vector<1x256xf32>
    %167 = arith.subf %165, %166 : vector<1x256xf32>
    %cst_96 = arith.constant 0.000000e+00 : f32
    %168 = vector.broadcast %cst_96 : f32 to vector<1x256xf32>
    %169 = arith.maximumf %167, %168 : vector<1x256xf32>
    %170 = vector.broadcast %160 : vector<1x256xf32> to vector<4x256xf32>
    %171 = arith.subf %152, %170 : vector<4x256xf32>
    %cst_97 = arith.constant 9.99999974E-6 : f32
    %172 = vector.broadcast %cst_97 : f32 to vector<1x256xf32>
    %173 = arith.addf %169, %172 : vector<1x256xf32>
    %174 = math.rsqrt %173 : vector<1x256xf32>
    %175 = vector.broadcast %174 : vector<1x256xf32> to vector<4x256xf32>
    %176 = arith.mulf %171, %175 : vector<4x256xf32>
    %177 = vector.broadcast %154 : vector<1x256xf32> to vector<4x256xf32>
    %178 = arith.mulf %176, %177 : vector<4x256xf32>
    %179 = vector.broadcast %156 : vector<1x256xf32> to vector<4x256xf32>
    %180 = arith.addf %178, %179 : vector<4x256xf32>
    %cst_98 = arith.constant 0.000000e+00 : f32
    %181 = vector.broadcast %cst_98 : f32 to vector<4x256xf32>
    %182 = arith.cmpf ogt, %180, %181 : vector<4x256xf32>
    %cst_99 = arith.constant 0.00999999977 : f32
    %183 = vector.broadcast %cst_99 : f32 to vector<4x256xf32>
    %184 = arith.mulf %183, %180 : vector<4x256xf32>
    %185 = arith.select %182, %180, %184 : vector<4x256xi1>, vector<4x256xf32>
    %c0_100 = arith.constant 0 : index
    %c0_101 = arith.constant 0 : index
    %c0_102 = arith.constant 0 : index
    %186 = vector.load %arg8[%c0_100, %c0_101, %c0_102] : memref<1x4x256xf32, #tpu.memory_space<vmem>>, vector<1x4x256xf32>
    %187 = vector.shape_cast %186 : vector<1x4x256xf32> to vector<4x256xf32>
    %188 = vector.shape_cast %185 : vector<4x256xf32> to vector<1x4x256xf32>
    tpu.vector_store %arg8[%c0_100, %c0_101, %c0_102], %188 {strides = array<i32>} : memref<1x4x256xf32, #tpu.memory_space<vmem>>, vector<1x4x256xf32>,
    return
  }
  func.func @transform_0(%arg0: i32) -> (i32, i32, i32) {
    %c0_i32 = arith.constant 0 : i32
    %c0_i32_0 = arith.constant 0 : i32
    %c0_i32_1 = arith.constant 0 : i32
    return %arg0, %c0_i32, %c0_i32_0 : i32, i32, i32
  }
  func.func @transform_1(%arg0: i32) -> (i32, i32, i32) {
    %c0_i32 = arith.constant 0 : i32
    %c0_i32_0 = arith.constant 0 : i32
    %c0_i32_1 = arith.constant 0 : i32
    return %arg0, %c0_i32, %c0_i32_0 : i32, i32, i32
  }
  func.func @transform_2(%arg0: i32) -> (i32, i32, i32) {
    %c0_i32 = arith.constant 0 : i32
    %c0_i32_0 = arith.constant 0 : i32
    %c0_i32_1 = arith.constant 0 : i32
    return %arg0, %c0_i32, %c0_i32_0 : i32, i32, i32
  }
  func.func @transform_3(%arg0: i32) -> (i32, i32, i32) {
    %c0_i32 = arith.constant 0 : i32
    %c0_i32_0 = arith.constant 0 : i32
    %c0_i32_1 = arith.constant 0 : i32
    return %arg0, %c0_i32, %c0_i32_0 : i32, i32, i32
  }
  func.func @transform_4(%arg0: i32) -> (i32, i32, i32, i32) {
    %c0_i32 = arith.constant 0 : i32
    %c0_i32_0 = arith.constant 0 : i32
    %c0_i32_1 = arith.constant 0 : i32
    %c0_i32_2 = arith.constant 0 : i32
    return %arg0, %c0_i32, %c0_i32_0, %c0_i32_1 : i32, i32, i32, i32
  }
  func.func @transform_5(%arg0: i32) -> (i32, i32, i32, i32) {
    %c0_i32 = arith.constant 0 : i32
    %c0_i32_0 = arith.constant 0 : i32
    %c0_i32_1 = arith.constant 0 : i32
    %c0_i32_2 = arith.constant 0 : i32
    return %arg0, %c0_i32, %c0_i32_0, %c0_i32_1 : i32, i32, i32, i32
  }
  func.func @transform_6(%arg0: i32) -> (i32, i32, i32, i32) {
    %c0_i32 = arith.constant 0 : i32
    %c0_i32_0 = arith.constant 0 : i32
    %c0_i32_1 = arith.constant 0 : i32
    %c0_i32_2 = arith.constant 0 : i32
    return %arg0, %c0_i32, %c0_i32_0, %c0_i32_1 : i32, i32, i32, i32
  }
  func.func @transform_7(%arg0: i32) -> (i32, i32, i32) {
    %c0_i32 = arith.constant 0 : i32
    %c0_i32_0 = arith.constant 0 : i32
    %c0_i32_1 = arith.constant 0 : i32
    return %arg0, %c0_i32, %c0_i32_0 : i32, i32, i32
  }
}

</mosaic_0001>

<llo_original>
// kernel: rt_generator_forward.3
$region0: #{rt_generator_forward.3}
  #allocation0 [shape = 'u32[]', space=smem, size = 0x4, offset = 0x4, fixed_abs, tag = 'smem constant byte address 0x4 - core index']
  #allocation1 [shape = 'u32[144,128]{1,0:T(1,128)}', space=vmem, size = 0x12000, scoped, tag = 'internal scratch']
  %s0 = inlined_call_operand.vmem [shape: bf16[2,4,128], index: 0, kind: input, shape index: {}]
  %s1 = inlined_call_operand.vmem [shape: bf16[2,128,256], index: 1, kind: input, shape index: {}]
  %s2 = inlined_call_operand.vmem [shape: f32[2,1,256], index: 2, kind: input, shape index: {}]
  %s3 = inlined_call_operand.vmem [shape: f32[2,1,256], index: 3, kind: input, shape index: {}]
  %s4 = inlined_call_operand.hbm [shape: bf16[2,4,256,256], index: 4, kind: input, shape index: {}]
  %s5 = inlined_call_operand.vmem [shape: f32[2,4,1,256], index: 5, kind: input, shape index: {}]
  %s6 = inlined_call_operand.vmem [shape: f32[2,4,1,256], index: 6, kind: input, shape index: {}]
  %s7 = inlined_call_operand.vmem [shape: f32[2,4,256], index: 7, kind: output, shape index: {}]
  %s8 = sld [smem:[#allocation0]]
  $region65: #{rt_generator_forward.3} parent=0
    _
  %s10 = ssub.s32 1, %s8
  %s11 = scalar_select 0, %s10, %s8
  $region1: #{rt_generator_forward.3} parent=0
    #allocation2 [shape = 'u8[1048576]{0}', space=vmem, size = 0x100000, scoped, tag = 'input window, operand 4']
    #allocation3 [shape = 's32[2]{0}', space=sflag, size = 0x8, scoped, tag = 'scoped memory for rt_generator_forward.3']
    %12 = vsyncpa [#allocation3], 0
    %s13 = scalar_lea.sflag [#allocation3], 1
    %14 = vsyncpa %s13, 0
    loop: start=0, step=1, limit=4
    $region2: #{rt_generator_forward.3} parent=1 // loop_pre_header
      _
    $region3: #{rt_generator_forward.3} parent=1 // loop_header
      %s16 = sphi 0, %s20
      %p17 = scmp.ge.s32.totalorder %s16, 4
      %s26 = sphi 0, %s28
      %s29 = sphi 0, %s26
      %s30 = sphi 0, %s29
      %s46 = sphi 0, %s30
      %s52 = sphi 0, %s54
      %s55 = sphi 0, %s52
      %s56 = sphi 0, %s55
      %s72 = sphi 0, %s56
      %s78 = sphi 0, %s80
      %s81 = sphi 0, %s78
      %s82 = sphi 0, %s81
      %s98 = sphi 0, %s82
      %s104 = sphi 0, %s106
      %s107 = sphi 0, %s104
      %s108 = sphi 0, %s107
      %s124 = sphi 0, %s108
      %s130 = sphi 0, %s132
      %s133 = sphi 0, %s130
      %s134 = sphi 0, %s133
      %s150 = sphi 0, %s134
      %s156 = sphi 0, %s158
      %s159 = sphi 0, %s156
      %s160 = sphi 0, %s159
      %s176 = sphi 0, %s160
      %s182 = sphi 0, %s184
      %s185 = sphi 0, %s182
      %s186 = sphi 0, %s185
      %s202 = sphi 0, %s186
      %s208 = sphi 0, %s210
      %s211 = sphi 0, %s208
      %s212 = sphi 0, %s211
      %s228 = sphi 0, %s212
    $region4: #{rt_generator_forward.3} parent=1 // loop_header_branch
      %19 = sbr.rel (%p17) target = $region8
    $region5: #{rt_generator_forward.3} parent=1 // loop_body
      %s21 = ssub.s32 %s16, 1
      %s22 = ssub.s32 %s16, 2
      %s23 = sadd.s32 %s16, 1
      %s24 = ssub.s32 %s16, %s23
      %p25 = scmp.eq.s32.totalorder %s24, 0
      %s27 = sadd.s32 %s26, 1
      %s28 = scalar_select %p25, %s26, %s27
      %p31 = pneg %p25
      %p32 = scmp.eq.s32.totalorder %s16, 1
      %p33 = por %p31, %p32
      %p34 = scmp.ne.s32.totalorder %s26, %s29
      %p35 = scmp.eq.s32.totalorder %s16, 0
      %p36 = por %p34, %p35
      %p37 = scmp.ne.s32.totalorder %s26, %s29
      %p38 = scmp.eq.s32.totalorder %s21, 1
      %p39 = por %p37, %p38
      %p40 = scmp.ne.s32.totalorder %s29, %s30
      %p41 = scmp.eq.s32.totalorder %s21, 0
      %p42 = por %p40, %p41
      %p43 = scmp.ne.s32.totalorder %s29, %s30
      %p44 = scmp.eq.s32.totalorder %s22, 1
      %p45 = por %p43, %p44
      %p47 = scmp.ne.s32.totalorder %s30, %s46
      %p48 = scmp.eq.s32.totalorder %s22, 0
      %p49 = por %p47, %p48
      %s50 = ssub.s32 %s16, %s23
      %p51 = scmp.eq.s32.totalorder %s50, 0
      %s53 = sadd.s32 %s52, 1
      %s54 = scalar_select %p51, %s52, %s53
      %p57 = pneg %p51
      %p58 = scmp.eq.s32.totalorder %s16, 1
      %p59 = por %p57, %p58
      %p60 = scmp.ne.s32.totalorder %s52, %s55
      %p61 = scmp.eq.s32.totalorder %s16, 0
      %p62 = por %p60, %p61
      %p63 = scmp.ne.s32.totalorder %s52, %s55
      %p64 = scmp.eq.s32.totalorder %s21, 1
      %p65 = por %p63, %p64
      %p66 = scmp.ne.s32.totalorder %s55, %s56
      %p67 = scmp.eq.s32.totalorder %s21, 0
      %p68 = por %p66, %p67
      %p69 = scmp.ne.s32.totalorder %s55, %s56
      %p70 = scmp.eq.s32.totalorder %s22, 1
      %p71 = por %p69, %p70
      %p73 = scmp.ne.s32.totalorder %s56, %s72
      %p74 = scmp.eq.s32.totalorder %s22, 0
      %p75 = por %p73, %p74
      %s76 = ssub.s32 %s16, %s23
      %p77 = scmp.eq.s32.totalorder %s76, 0
      %s79 = sadd.s32 %s78, 1
      %s80 = scalar_select %p77, %s78, %s79
      %p83 = pneg %p77
      %p84 = scmp.eq.s32.totalorder %s16, 1
      %p85 = por %p83, %p84
      %p86 = scmp.ne.s32.totalorder %s78, %s81
      %p87 = scmp.eq.s32.totalorder %s16, 0
      %p88 = por %p86, %p87
      %p89 = scmp.ne.s32.totalorder %s78, %s81
      %p90 = scmp.eq.s32.totalorder %s21, 1
      %p91 = por %p89, %p90
      %p92 = scmp.ne.s32.totalorder %s81, %s82
      %p93 = scmp.eq.s32.totalorder %s21, 0
      %p94 = por %p92, %p93
      %p95 = scmp.ne.s32.totalorder %s81, %s82
      %p96 = scmp.eq.s32.totalorder %s22, 1
      %p97 = por %p95, %p96
      %p99 = scmp.ne.s32.totalorder %s82, %s98
      %p100 = scmp.eq.s32.totalorder %s22, 0
      %p101 = por %p99, %p100
      %s102 = ssub.s32 %s16, %s23
      %p103 = scmp.eq.s32.totalorder %s102, 0
      %s105 = sadd.s32 %s104, 1
      %s106 = scalar_select %p103, %s104, %s105
      %p109 = pneg %p103
      %p110 = scmp.eq.s32.totalorder %s16, 1
      %p111 = por %p109, %p110
      %p112 = scmp.ne.s32.totalorder %s104, %s107
      %p113 = scmp.eq.s32.totalorder %s16, 0
      %p114 = por %p112, %p113
      %p115 = scmp.ne.s32.totalorder %s104, %s107
      %p116 = scmp.eq.s32.totalorder %s21, 1
      %p117 = por %p115, %p116
      %p118 = scmp.ne.s32.totalorder %s107, %s108
      %p119 = scmp.eq.s32.totalorder %s21, 0
      %p120 = por %p118, %p119
      %p121 = scmp.ne.s32.totalorder %s107, %s108
      %p122 = scmp.eq.s32.totalorder %s22, 1
      %p123 = por %p121, %p122
      %p125 = scmp.ne.s32.totalorder %s108, %s124
      %p126 = scmp.eq.s32.totalorder %s22, 0
      %p127 = por %p125, %p126
      %s128 = ssub.s32 %s16, %s23
      %p129 = scmp.eq.s32.totalorder %s128, 0
      %s131 = sadd.s32 %s130, 1
      %s132 = scalar_select %p129, %s130, %s131
      %p135 = pneg %p129
      %p136 = scmp.eq.s32.totalorder %s16, 1
      %p137 = por %p135, %p136
      %p138 = scmp.ne.s32.totalorder %s130, %s133
      %p139 = scmp.eq.s32.totalorder %s16, 0
      %p140 = por %p138, %p139
      %p141 = scmp.ne.s32.totalorder %s130, %s133
      %p142 = scmp.eq.s32.totalorder %s21, 1
      %p143 = por %p141, %p142
      %p144 = scmp.ne.s32.totalorder %s133, %s134
      %p145 = scmp.eq.s32.totalorder %s21, 0
      %p146 = por %p144, %p145
      %p147 = scmp.ne.s32.totalorder %s133, %s134
      %p148 = scmp.eq.s32.totalorder %s22, 1
      %p149 = por %p147, %p148
      %p151 = scmp.ne.s32.totalorder %s134, %s150
      %p152 = scmp.eq.s32.totalorder %s22, 0
      %p153 = por %p151, %p152
      %s154 = ssub.s32 %s16, %s23
      %p155 = scmp.eq.s32.totalorder %s154, 0
      %s157 = sadd.s32 %s156, 1
      %s158 = scalar_select %p155, %s156, %s157
      %p161 = pneg %p155
      %p162 = scmp.eq.s32.totalorder %s16, 1
      %p163 = por %p161, %p162
      %p164 = scmp.ne.s32.totalorder %s156, %s159
      %p165 = scmp.eq.s32.totalorder %s16, 0
      %p166 = por %p164, %p165
      %p167 = scmp.ne.s32.totalorder %s156, %s159
      %p168 = scmp.eq.s32.totalorder %s21, 1
      %p169 = por %p167, %p168
      %p170 = scmp.ne.s32.totalorder %s159, %s160
      %p171 = scmp.eq.s32.totalorder %s21, 0
      %p172 = por %p170, %p171
      %p173 = scmp.ne.s32.totalorder %s159, %s160
      %p174 = scmp.eq.s32.totalorder %s22, 1
      %p175 = por %p173, %p174
      %p177 = scmp.ne.s32.totalorder %s160, %s176
      %p178 = scmp.eq.s32.totalorder %s22, 0
      %p179 = por %p177, %p178
      %s180 = ssub.s32 %s16, %s23
      %p181 = scmp.eq.s32.totalorder %s180, 0
      %s183 = sadd.s32 %s182, 1
      %s184 = scalar_select %p181, %s182, %s183
      %p187 = pneg %p181
      %p188 = scmp.eq.s32.totalorder %s16, 1
      %p189 = por %p187, %p188
      %p190 = scmp.ne.s32.totalorder %s182, %s185
      %p191 = scmp.eq.s32.totalorder %s16, 0
      %p192 = por %p190, %p191
      %p193 = scmp.ne.s32.totalorder %s182, %s185
      %p194 = scmp.eq.s32.totalorder %s21, 1
      %p195 = por %p193, %p194
      %p196 = scmp.ne.s32.totalorder %s185, %s186
      %p197 = scmp.eq.s32.totalorder %s21, 0
      %p198 = por %p196, %p197
      %p199 = scmp.ne.s32.totalorder %s185, %s186
      %p200 = scmp.eq.s32.totalorder %s22, 1
      %p201 = por %p199, %p200
      %p203 = scmp.ne.s32.totalorder %s186, %s202
      %p204 = scmp.eq.s32.totalorder %s22, 0
      %p205 = por %p203, %p204
      %s206 = ssub.s32 %s16, %s23
      %p207 = scmp.eq.s32.totalorder %s206, 0
      %s209 = sadd.s32 %s208, 1
      %s210 = scalar_select %p207, %s208, %s209
      %p213 = pneg %p207
      %p214 = scmp.eq.s32.totalorder %s16, 1
      %p215 = por %p213, %p214
      %p216 = scmp.ne.s32.totalorder %s208, %s211
      %p217 = scmp.eq.s32.totalorder %s16, 0
      %p218 = por %p216, %p217
      %p219 = scmp.ne.s32.totalorder %s208, %s211
      %p220 = scmp.eq.s32.totalorder %s21, 1
      %p221 = por %p219, %p220
      %p222 = scmp.ne.s32.totalorder %s211, %s212
      %p223 = scmp.eq.s32.totalorder %s21, 0
      %p224 = por %p222, %p223
      %p225 = scmp.ne.s32.totalorder %s211, %s212
      %p226 = scmp.eq.s32.totalorder %s22, 1
      %p227 = por %p225, %p226
      %p229 = scmp.ne.s32.totalorder %s212, %s228
      %p230 = scmp.eq.s32.totalorder %s22, 0
      %p231 = por %p229, %p230
      %p232 = scmp.le.s32.totalorder 1, %s16
      %p233 = scmp.lt.s32.totalorder %s16, 3
      %p234 = pnand %p232, %p233
      %p235 = pneg %p234
      // Predicated region
      $region9: #{rt_generator_forward.3} parent=5 // pred_check
        _
      $region10: #{rt_generator_forward.3} parent=5 // pred_check_branch
        %237 = sbr.rel (%p234) target = $region12
      $region11: #{rt_generator_forward.3} parent=5 // pred_region
        %s238 = ssub.s32 %s16, 1
      $region12: #{rt_generator_forward.3} parent=5 // pred_fallthru
        _
      %p239 = scmp.lt.s32.totalorder %s16, 2
      // Predicated region
      $region13: #{rt_generator_forward.3} parent=5 // pred_check
        %p240 = pneg %p239
      $region14: #{rt_generator_forward.3} parent=5 // pred_check_branch
        %242 = sbr.rel (%p240) target = $region16
      $region15: #{rt_generator_forward.3} parent=5 // pred_region
        // Predicated region
        $region17: #{rt_generator_forward.3} parent=15 // pred_check
          %p243 = pneg %p36
        $region18: #{rt_generator_forward.3} parent=15 // pred_check_branch
          %245 = sbr.rel (%p243) target = $region20
        $region19: #{rt_generator_forward.3} parent=15 // pred_region
          %p246 = scmp.lt.s32.totalorder %s16, 1
          %s247 = scalar_select %p246, %s16, 1
          %s248 = smul.addr %s247, 2
          %s249 = scalar_lea.vmem %s0, %s248
        $region20: #{rt_generator_forward.3} parent=15 // pred_fallthru
          _
        // Predicated region
        $region21: #{rt_generator_forward.3} parent=15 // pred_check
          %p250 = pneg %p62
        $region22: #{rt_generator_forward.3} parent=15 // pred_check_branch
          %252 = sbr.rel (%p250) target = $region24
        $region23: #{rt_generator_forward.3} parent=15 // pred_region
          %p253 = scmp.lt.s32.totalorder %s16, 1
          %s254 = scalar_select %p253, %s16, 1
          %s255 = smul.addr %s254, 32
          %s256 = smul.addr %s255, 4
          %s257 = scalar_lea.vmem %s1, %s256
        $region24: #{rt_generator_forward.3} parent=15 // pred_fallthru
          _
        // Predicated region
        $region25: #{rt_generator_forward.3} parent=15 // pred_check
          %p258 = pneg %p88
        $region26: #{rt_generator_forward.3} parent=15 // pred_check_branch
          %260 = sbr.rel (%p258) target = $region28
        $region27: #{rt_generator_forward.3} parent=15 // pred_region
          %p261 = scmp.lt.s32.totalorder %s16, 1
          %s262 = scalar_select %p261, %s16, 1
          %s263 = smul.addr %s262, 2
          %s264 = scalar_lea.vmem %s2, %s263
        $region28: #{rt_generator_forward.3} parent=15 // pred_fallthru
          _
        // Predicated region
        $region29: #{rt_generator_forward.3} parent=15 // pred_check
          %p265 = pneg %p114
        $region30: #{rt_generator_forward.3} parent=15 // pred_check_branch
          %267 = sbr.rel (%p265) target = $region32
        $region31: #{rt_generator_forward.3} parent=15 // pred_region
          %p268 = scmp.lt.s32.totalorder %s16, 1
          %s269 = scalar_select %p268, %s16, 1
          %s270 = smul.addr %s269, 2
          %s271 = scalar_lea.vmem %s3, %s270
        $region32: #{rt_generator_forward.3} parent=15 // pred_fallthru
          _
        // Predicated region
        $region33: #{rt_generator_forward.3} parent=15 // pred_check
          %p272 = pneg %p140
        $region34: #{rt_generator_forward.3} parent=15 // pred_check_branch
          %274 = sbr.rel (%p272) target = $region36
        $region35: #{rt_generator_forward.3} parent=15 // pred_region
          %s275 = sand.u32 %s130, 1
          %s276 = scalar_lea.sflag [#allocation3], %s275
          %s277 = sand.u32 %s130, 1
          %s278 = smul.addr %s277, 1024
          %s279 = scalar_lea.vmem [#allocation2], %s278
          %s281 = ssub.s32 16384, 16384
          %282 = vsyncadd %s276, %s281
          %s283 = smul.addr %s16, 256
          %s284 = smul.addr %s283, 64
          %s285 = scalar_lea.hbm %s4, %s284
          %s286 = sshll.u32 %s279, 4
          %s287 = int_to_ptr.vmem [resolvable:$true] %s286
          %292 = dma.hbm_to_vmem [thread:$0]  %s285, 16384, %s287, %s276, 128, 128, 8
        $region36: #{rt_generator_forward.3} parent=15 // pred_fallthru
          _
        // Predicated region
        $region37: #{rt_generator_forward.3} parent=15 // pred_check
          %p293 = pneg %p166
        $region38: #{rt_generator_forward.3} parent=15 // pred_check_branch
          %295 = sbr.rel (%p293) target = $region40
        $region39: #{rt_generator_forward.3} parent=15 // pred_region
          %p296 = scmp.lt.s32.totalorder %s16, 1
          %s297 = scalar_select %p296, %s16, 1
          %s298 = smul.addr %s297, 8
          %s299 = scalar_lea.vmem %s5, %s298
        $region40: #{rt_generator_forward.3} parent=15 // pred_fallthru
          _
        // Predicated region
        $region41: #{rt_generator_forward.3} parent=15 // pred_check
          %p300 = pneg %p192
        $region42: #{rt_generator_forward.3} parent=15 // pred_check_branch
          %302 = sbr.rel (%p300) target = $region44
        $region43: #{rt_generator_forward.3} parent=15 // pred_region
          %p303 = scmp.lt.s32.totalorder %s16, 1
          %s304 = scalar_select %p303, %s16, 1
          %s305 = smul.addr %s304, 8
          %s306 = scalar_lea.vmem %s6, %s305
        $region44: #{rt_generator_forward.3} parent=15 // pred_fallthru
          _
      $region16: #{rt_generator_forward.3} parent=5 // pred_fallthru
        _
      %p307 = scmp.le.s32.totalorder 1, %s16
      %p308 = scmp.lt.s32.totalorder %s16, 3
      %p309 = pnand %p307, %p308
      %p310 = pneg %p309
      // Predicated region
      $region45: #{rt_generator_forward.3} parent=5 // pred_check
        _
      $region46: #{rt_generator_forward.3} parent=5 // pred_check_branch
        %312 = sbr.rel (%p309) target = $region48
      $region47: #{rt_generator_forward.3} parent=5 // pred_region
        %s313 = ssub.s32 %s16, 1
        %s314 = sand.u32 %s133, 1
        %s315 = scalar_lea.sflag [#allocation3], %s314
        %s316 = sand.u32 %s133, 1
        %s317 = smul.addr %s316, 1024
        %s318 = scalar_lea.vmem [#allocation2], %s317
        // Predicated region
        $region49: #{rt_generator_forward.3} parent=47 // pred_check
          %p319 = pneg %p146
        $region50: #{rt_generator_forward.3} parent=47 // pred_check_branch
          %321 = sbr.rel (%p319) target = $region52
        $region51: #{rt_generator_forward.3} parent=47 // pred_region
          %322 = dma.done %s315, 16384
        $region52: #{rt_generator_forward.3} parent=47 // pred_fallthru
          _
        %p323 = scmp.lt.s32.totalorder %s21, 1
        %s324 = scalar_select %p323, %s21, 1
        %s325 = smul.addr %s324, 2
        %s326 = scalar_lea.vmem %s0, %s325
        %p327 = pneg %p42
        %p328 = pneg %p39
        %p329 = scmp.lt.s32.totalorder %s21, 1
        %s330 = scalar_select %p329, %s21, 1
        %s331 = smul.addr %s330, 32
        %s332 = smul.addr %s331, 4
        %s333 = scalar_lea.vmem %s1, %s332
        %p334 = pneg %p68
        %p335 = pneg %p65
        %p336 = scmp.lt.s32.totalorder %s21, 1
        %s337 = scalar_select %p336, %s21, 1
        %s338 = smul.addr %s337, 2
        %s339 = scalar_lea.vmem %s2, %s338
        %p340 = pneg %p94
        %p341 = pneg %p91
        %p342 = scmp.lt.s32.totalorder %s21, 1
        %s343 = scalar_select %p342, %s21, 1
        %s344 = smul.addr %s343, 2
        %s345 = scalar_lea.vmem %s3, %s344
        %p346 = pneg %p120
        %p347 = pneg %p117
        %s348 = sand.u32 %s133, 1
        %s349 = scalar_lea.sflag [#allocation3], %s348
        %s350 = sand.u32 %s133, 1
        %s351 = smul.addr %s350, 1024
        %s352 = scalar_lea.vmem [#allocation2], %s351
        %p353 = pneg %p146
        %p354 = pneg %p143
        %p355 = scmp.lt.s32.totalorder %s21, 1
        %s356 = scalar_select %p355, %s21, 1
        %s357 = smul.addr %s356, 8
        %s358 = scalar_lea.vmem %s5, %s357
        %p359 = pneg %p172
        %p360 = pneg %p169
        %p361 = scmp.lt.s32.totalorder %s21, 1
        %s362 = scalar_select %p361, %s21, 1
        %s363 = smul.addr %s362, 8
        %s364 = scalar_lea.vmem %s6, %s363
        %p365 = pneg %p198
        %p366 = pneg %p195
        %p367 = pneg %p224
        %p368 = pneg %p221
        %p369 = scmp.lt.s32.totalorder %s21, 1
        %s370 = scalar_select %p369, %s21, 1
        %s371 = smul.addr %s370, 2
        %s372 = smul.addr %s371, 4
        %s373 = scalar_lea.vmem %s7, %s372
        %p374 = scmp.lt.s32.totalorder %s21, 1
        %s375 = scalar_select %p374, %s21, 1
        %s376 = smul.addr %s375, 2
        %s377 = scalar_lea.vmem %s0, %s376
        %p378 = scmp.lt.s32.totalorder %s21, 1
        %s379 = scalar_select %p378, %s21, 1
        %s380 = smul.addr %s379, 32
        %s381 = smul.addr %s380, 4
        %s382 = scalar_lea.vmem %s1, %s381
        %p383 = scmp.lt.s32.totalorder %s21, 1
        %s384 = scalar_select %p383, %s21, 1
        %s385 = smul.addr %s384, 2
        %s386 = scalar_lea.vmem %s2, %s385
        %p387 = scmp.lt.s32.totalorder %s21, 1
        %s388 = scalar_select %p387, %s21, 1
        %s389 = smul.addr %s388, 2
        %s390 = scalar_lea.vmem %s3, %s389
        %p391 = scmp.lt.s32.totalorder %s21, 1
        %s392 = scalar_select %p391, %s21, 1
        %s393 = smul.addr %s392, 8
        %s394 = scalar_lea.vmem %s5, %s393
        %p395 = scmp.lt.s32.totalorder %s21, 1
        %s396 = scalar_select %p395, %s21, 1
        %s397 = smul.addr %s396, 8
        %s398 = scalar_lea.vmem %s6, %s397
        %p399 = scmp.lt.s32.totalorder %s21, 1
        %s400 = scalar_select %p399, %s21, 1
        %s401 = smul.addr %s400, 2
        %s402 = smul.addr %s401, 4
        %s403 = scalar_lea.vmem %s7, %s402
        %v405 = vld [vmem:[%s377] sm:$0x3]
        %v406 = vld [vmem:[%s382] sm:$0xff]
        %v407 = vld [vmem:[%s382 + $0x8] sm:$0xff]
        %v408 = vld [vmem:[%s382 + $0x10] sm:$0xff]
        %v409 = vld [vmem:[%s382 + $0x18] sm:$0xff]
        %v410 = vld [vmem:[%s382 + $0x20] sm:$0xff]
        %v411 = vld [vmem:[%s382 + $0x28] sm:$0xff]
        %v412 = vld [vmem:[%s382 + $0x30] sm:$0xff]
        %v413 = vld [vmem:[%s382 + $0x38] sm:$0xff]
        %v414 = vld [vmem:[%s382 + $0x40] sm:$0xff]
        %v415 = vld [vmem:[%s382 + $0x48] sm:$0xff]
        %v416 = vld [vmem:[%s382 + $0x50] sm:$0xff]
        %v417 = vld [vmem:[%s382 + $0x58] sm:$0xff]
        %v418 = vld [vmem:[%s382 + $0x60] sm:$0xff]
        %v419 = vld [vmem:[%s382 + $0x68] sm:$0xff]
        %v420 = vld [vmem:[%s382 + $0x70] sm:$0xff]
        %v421 = vld [vmem:[%s382 + $0x78] sm:$0xff]
        %v438 = vunpack.c.l.b16 %v406
        %v439 = vunpack.c.h.b16 %v406
        %v440 = vunpack.c.l.b16 %v407
        %v441 = vunpack.c.h.b16 %v407
        %v442 = vunpack.c.l.b16 %v408
        %v443 = vunpack.c.h.b16 %v408
        %v444 = vunpack.c.l.b16 %v409
        %v445 = vunpack.c.h.b16 %v409
        %v446 = vunpack.c.l.b16 %v410
        %v447 = vunpack.c.h.b16 %v410
        %v448 = vunpack.c.l.b16 %v411
        %v449 = vunpack.c.h.b16 %v411
        %v450 = vunpack.c.l.b16 %v412
        %v451 = vunpack.c.h.b16 %v412
        %v452 = vunpack.c.l.b16 %v413
        %v453 = vunpack.c.h.b16 %v413
        %v454 = vunpack.c.l.b16 %v414
        %v455 = vunpack.c.h.b16 %v414
        %v456 = vunpack.c.l.b16 %v415
        %v457 = vunpack.c.h.b16 %v415
        %v458 = vunpack.c.l.b16 %v416
        %v459 = vunpack.c.h.b16 %v416
        %v460 = vunpack.c.l.b16 %v417
        %v461 = vunpack.c.h.b16 %v417
        %v462 = vunpack.c.l.b16 %v418
        %v463 = vunpack.c.h.b16 %v418
        %v464 = vunpack.c.l.b16 %v419
        %v465 = vunpack.c.h.b16 %v419
        %v466 = vunpack.c.l.b16 %v420
        %v467 = vunpack.c.h.b16 %v420
        %v468 = vunpack.c.l.b16 %v421
        %v469 = vunpack.c.h.b16 %v421
        %v470 = vpack.c.b16 %v440, %v438
        %v471 = vpack.c.b16 %v441, %v439
        %v472 = vpack.c.b16 %v444, %v442
        %v473 = vpack.c.b16 %v445, %v443
        %v474 = vpack.c.b16 %v448, %v446
        %v475 = vpack.c.b16 %v449, %v447
        %v476 = vpack.c.b16 %v452, %v450
        %v477 = vpack.c.b16 %v453, %v451
        %v478 = vpack.c.b16 %v456, %v454
        %v479 = vpack.c.b16 %v457, %v455
        %v480 = vpack.c.b16 %v460, %v458
        %v481 = vpack.c.b16 %v461, %v459
        %v482 = vpack.c.b16 %v464, %v462
        %v483 = vpack.c.b16 %v465, %v463
        %v484 = vpack.c.b16 %v468, %v466
        %v485 = vpack.c.b16 %v469, %v467
        %502 = vmatprep.subr.bf16.mxu0 %v485
        %503 = vmatpush1.bf16.msra.mxu0 %v484
        %504 = vmatprep.subr.bf16.mxu0 %v483
        %505 = vmatpush1.bf16.msra.mxu0 %v482
        %506 = vmatprep.subr.bf16.mxu0 %v481
        %507 = vmatpush1.bf16.msra.mxu0 %v480
        %508 = vmatprep.subr.bf16.mxu0 %v479
        %509 = vmatpush1.bf16.msra.mxu0 %v478
        %510 = vmatprep.subr.bf16.mxu0 %v477
        %511 = vmatpush1.bf16.msra.mxu0 %v476
        %512 = vmatprep.subr.bf16.mxu0 %v475
        %513 = vmatpush1.bf16.msra.mxu0 %v474
        %514 = vmatprep.subr.bf16.mxu0 %v473
        %515 = vmatpush1.bf16.msra.mxu0 %v472
        %516 = vmatprep.subr.bf16.mxu0 %v471
        %517 = vmatpush1.bf16.msra.mxu0 %v470
        %518 = vmatprep.subr.bf16.mxu0 0
        %519 = vmatpush2.bf16.msra.mxu0 0
        %520 = vmatprep.subr.bf16.mxu0 0
        %521 = vmatpush2.bf16.msra.mxu0 0
        %522 = vmatprep.subr.bf16.mxu0 0
        %523 = vmatpush2.bf16.msra.mxu0 0
        %524 = vmatprep.subr.bf16.mxu0 0
        %525 = vmatpush2.bf16.msra.mxu0 0
        %526 = vmatprep.subr.bf16.mxu0 0
        %527 = vmatpush2.bf16.msra.mxu0 0
        %528 = vmatprep.subr.bf16.mxu0 0
        %529 = vmatpush2.bf16.msra.mxu0 0
        %530 = vmatprep.subr.bf16.mxu0 0
        %531 = vmatpush2.bf16.msra.mxu0 0
        %532 = vmatprep.subr.bf16.mxu0 0
        %533 = vmatpush2.bf16.msra.mxu0 0
        %534 = vmatprep.mubr.bf16.mxu0 0
        %535 = vmatmul.mubr.bf16.gmra.mxu0 %v405
        %v536 = vpop.f32.mrf.mxu0
        %v537 = vadd.f32 0.0, %v536
        %v538 = vpop.f32.mrf.mxu0
        %v539 = vadd.f32 0.0, %v538
        %v540 = vpop.f32.mrf.mxu0
        %v541 = vpop.f32.mrf.mxu0
        %542 = vdwg.mxu0
        %v543 = vld [vmem:[%s386] sm:$0x3]
        %v544 = vld [vmem:[%s390] sm:$0x3]
        %vm545 = vcmask 1043456
        %v546 = vsel %vm545, %v537, 0.0
        %v547 = vrot.slane %v546, 4
        %v548 = vadd.f32 %v546, %v547
        %v549 = vrot.slane %v548, 2
        %v550 = vadd.f32 %v548, %v549
        %v551 = vrot.slane %v550, 1
        %v552 = vadd.f32 %v550, %v551
        %v553 = vsel %vm545, %v539, 0.0
        %v554 = vrot.slane %v553, 4
        %v555 = vadd.f32 %v553, %v554
        %v556 = vrot.slane %v555, 2
        %v557 = vadd.f32 %v555, %v556
        %v558 = vrot.slane %v557, 1
        %v559 = vadd.f32 %v557, %v558
        %v560 = vrcp.pop 4.0
        %v561 = vmul.f32 %v552, %v560
        %v562 = vmul.f32 %v559, %v560
        %v563 = vmul.f32 %v537, %v537
        %v564 = vmul.f32 %v539, %v539
        %v565 = vsel %vm545, %v563, 0.0
        %v566 = vrot.slane %v565, 4
        %v567 = vadd.f32 %v565, %v566
        %v568 = vrot.slane %v567, 2
        %v569 = vadd.f32 %v567, %v568
        %v570 = vrot.slane %v569, 1
        %v571 = vadd.f32 %v569, %v570
        %v572 = vsel %vm545, %v564, 0.0
        %v573 = vrot.slane %v572, 4
        %v574 = vadd.f32 %v572, %v573
        %v575 = vrot.slane %v574, 2
        %v576 = vadd.f32 %v574, %v575
        %v577 = vrot.slane %v576, 1
        %v578 = vadd.f32 %v576, %v577
        %v579 = vmul.f32 %v571, %v560
        %v580 = vmul.f32 %v578, %v560
        %v581 = vmul.f32 %v561, %v561
        %v582 = vmul.f32 %v562, %v562
        %v583 = vsub.f32 %v579, %v581
        %v584 = vsub.f32 %v580, %v582
        %v585 = vmax.f32 %v583, 0.0
        %v586 = vmax.f32 %v584, 0.0
        %v587 = vsub.f32 %v537, %v561
        %v588 = vsub.f32 %v539, %v562
        %v589 = vadd.f32 %v585, 1e-05
        %v590 = vadd.f32 %v586, 1e-05
        %v591 = vrsqrt.pop %v589
        %v592 = vrsqrt.pop %v590
        %v593 = vmul.f32 %v587, %v591
        %v594 = vmul.f32 %v588, %v592
        %v596 = vlaneseq
        %v597 = vshrl.u32 %v596, 7
        %v598 = vsub.s32 0, %v597
        %v599 = vrot.slane %v543, %v598
        %v600 = vlaneseq
        %v601 = vshrl.u32 %v600, 7
        %v602 = vsub.s32 1, %v601
        %v603 = vrot.slane %v543, %v602
        %v606 = vmul.f32 %v593, %v599
        %v607 = vmul.f32 %v594, %v603
        %v609 = vlaneseq
        %v610 = vshrl.u32 %v609, 7
        %v611 = vsub.s32 0, %v610
        %v612 = vrot.slane %v544, %v611
        %v613 = vlaneseq
        %v614 = vshrl.u32 %v613, 7
        %v615 = vsub.s32 1, %v614
        %v616 = vrot.slane %v544, %v615
        %v619 = vadd.f32 %v606, %v612
        %v620 = vadd.f32 %v607, %v616
        %vm621 = vcmp.gt.f32.partialorder %v619, 0.0
        %vm622 = vcmp.gt.f32.partialorder %v620, 0.0
        %v623 = vmul.f32 %v619, 0.01
        %v624 = vmul.f32 %v620, 0.01
        %v625 = vsel %vm621, %v619, %v623
        %v626 = vsel %vm622, %v620, %v624
        %v627 = vpack.c.bf16 %v625, %v625
        %v628 = vpack.c.bf16 %v626, %v626
        %v629 = vld [vmem:[%s318] sm:$0xff]
        %v630 = vld [vmem:[%s318 + $0x8] sm:$0xff]
        %v631 = vld [vmem:[%s318 + $0x10] sm:$0xff]
        %v632 = vld [vmem:[%s318 + $0x18] sm:$0xff]
        %v633 = vld [vmem:[%s318 + $0x20] sm:$0xff]
        %v634 = vld [vmem:[%s318 + $0x28] sm:$0xff]
        %v635 = vld [vmem:[%s318 + $0x30] sm:$0xff]
        %v636 = vld [vmem:[%s318 + $0x38] sm:$0xff]
        %v637 = vld [vmem:[%s318 + $0x40] sm:$0xff]
        %v638 = vld [vmem:[%s318 + $0x48] sm:$0xff]
        %v639 = vld [vmem:[%s318 + $0x50] sm:$0xff]
        %v640 = vld [vmem:[%s318 + $0x58] sm:$0xff]
        %v641 = vld [vmem:[%s318 + $0x60] sm:$0xff]
        %v642 = vld [vmem:[%s318 + $0x68] sm:$0xff]
        %v643 = vld [vmem:[%s318 + $0x70] sm:$0xff]
        %v644 = vld [vmem:[%s318 + $0x78] sm:$0xff]
        %v645 = vld [vmem:[%s318 + $0x80] sm:$0xff]
        %v646 = vld [vmem:[%s318 + $0x88] sm:$0xff]
        %v647 = vld [vmem:[%s318 + $0x90] sm:$0xff]
        %v648 = vld [vmem:[%s318 + $0x98] sm:$0xff]
        %v649 = vld [vmem:[%s318 + $0xa0] sm:$0xff]
        %v650 = vld [vmem:[%s318 + $0xa8] sm:$0xff]
        %v651 = vld [vmem:[%s318 + $0xb0] sm:$0xff]
        %v652 = vld [vmem:[%s318 + $0xb8] sm:$0xff]
        %v653 = vld [vmem:[%s318 + $0xc0] sm:$0xff]
        %v654 = vld [vmem:[%s318 + $0xc8] sm:$0xff]
        %v655 = vld [vmem:[%s318 + $0xd0] sm:$0xff]
        %v656 = vld [vmem:[%s318 + $0xd8] sm:$0xff]
        %v657 = vld [vmem:[%s318 + $0xe0] sm:$0xff]
        %v658 = vld [vmem:[%s318 + $0xe8] sm:$0xff]
        %v659 = vld [vmem:[%s318 + $0xf0] sm:$0xff]
        %v660 = vld [vmem:[%s318 + $0xf8] sm:$0xff]
        %v693 = vunpack.c.l.b16 %v629
        %v694 = vunpack.c.h.b16 %v629
        %v695 = vunpack.c.l.b16 %v630
        %v696 = vunpack.c.h.b16 %v630
        %v697 = vunpack.c.l.b16 %v631
        %v698 = vunpack.c.h.b16 %v631
        %v699 = vunpack.c.l.b16 %v632
        %v700 = vunpack.c.h.b16 %v632
        %v701 = vunpack.c.l.b16 %v633
        %v702 = vunpack.c.h.b16 %v633
        %v703 = vunpack.c.l.b16 %v634
        %v704 = vunpack.c.h.b16 %v634
        %v705 = vunpack.c.l.b16 %v635
        %v706 = vunpack.c.h.b16 %v635
        %v707 = vunpack.c.l.b16 %v636
        %v708 = vunpack.c.h.b16 %v636
        %v709 = vunpack.c.l.b16 %v637
        %v710 = vunpack.c.h.b16 %v637
        %v711 = vunpack.c.l.b16 %v638
        %v712 = vunpack.c.h.b16 %v638
        %v713 = vunpack.c.l.b16 %v639
        %v714 = vunpack.c.h.b16 %v639
        %v715 = vunpack.c.l.b16 %v640
        %v716 = vunpack.c.h.b16 %v640
        %v717 = vunpack.c.l.b16 %v641
        %v718 = vunpack.c.h.b16 %v641
        %v719 = vunpack.c.l.b16 %v642
        %v720 = vunpack.c.h.b16 %v642
        %v721 = vunpack.c.l.b16 %v643
        %v722 = vunpack.c.h.b16 %v643
        %v723 = vunpack.c.l.b16 %v644
        %v724 = vunpack.c.h.b16 %v644
        %v725 = vunpack.c.l.b16 %v645
        %v726 = vunpack.c.h.b16 %v645
        %v727 = vunpack.c.l.b16 %v646
        %v728 = vunpack.c.h.b16 %v646
        %v729 = vunpack.c.l.b16 %v647
        %v730 = vunpack.c.h.b16 %v647
        %v731 = vunpack.c.l.b16 %v648
        %v732 = vunpack.c.h.b16 %v648
        %v733 = vunpack.c.l.b16 %v649
        %v734 = vunpack.c.h.b16 %v649
        %v735 = vunpack.c.l.b16 %v650
        %v736 = vunpack.c.h.b16 %v650
        %v737 = vunpack.c.l.b16 %v651
        %v738 = vunpack.c.h.b16 %v651
        %v739 = vunpack.c.l.b16 %v652
        %v740 = vunpack.c.h.b16 %v652
        %v741 = vunpack.c.l.b16 %v653
        %v742 = vunpack.c.h.b16 %v653
        %v743 = vunpack.c.l.b16 %v654
        %v744 = vunpack.c.h.b16 %v654
        %v745 = vunpack.c.l.b16 %v655
        %v746 = vunpack.c.h.b16 %v655
        %v747 = vunpack.c.l.b16 %v656
        %v748 = vunpack.c.h.b16 %v656
        %v749 = vunpack.c.l.b16 %v657
        %v750 = vunpack.c.h.b16 %v657
        %v751 = vunpack.c.l.b16 %v658
        %v752 = vunpack.c.h.b16 %v658
        %v753 = vunpack.c.l.b16 %v659
        %v754 = vunpack.c.h.b16 %v659
        %v755 = vunpack.c.l.b16 %v660
        %v756 = vunpack.c.h.b16 %v660
        %v757 = vpack.c.b16 %v695, %v693
        %v758 = vpack.c.b16 %v696, %v694
        %v759 = vpack.c.b16 %v699, %v697
        %v760 = vpack.c.b16 %v700, %v698
        %v761 = vpack.c.b16 %v703, %v701
        %v762 = vpack.c.b16 %v704, %v702
        %v763 = vpack.c.b16 %v707, %v705
        %v764 = vpack.c.b16 %v708, %v706
        %v765 = vpack.c.b16 %v711, %v709
        %v766 = vpack.c.b16 %v712, %v710
        %v767 = vpack.c.b16 %v715, %v713
        %v768 = vpack.c.b16 %v716, %v714
        %v769 = vpack.c.b16 %v719, %v717
        %v770 = vpack.c.b16 %v720, %v718
        %v771 = vpack.c.b16 %v723, %v721
        %v772 = vpack.c.b16 %v724, %v722
        %v773 = vpack.c.b16 %v727, %v725
        %v774 = vpack.c.b16 %v728, %v726
        %v775 = vpack.c.b16 %v731, %v729
        %v776 = vpack.c.b16 %v732, %v730
        %v777 = vpack.c.b16 %v735, %v733
        %v778 = vpack.c.b16 %v736, %v734
        %v779 = vpack.c.b16 %v739, %v737
        %v780 = vpack.c.b16 %v740, %v738
        %v781 = vpack.c.b16 %v743, %v741
        %v782 = vpack.c.b16 %v744, %v742
        %v783 = vpack.c.b16 %v747, %v745
        %v784 = vpack.c.b16 %v748, %v746
        %v785 = vpack.c.b16 %v751, %v749
        %v786 = vpack.c.b16 %v752, %v750
        %v787 = vpack.c.b16 %v755, %v753
        %v788 = vpack.c.b16 %v756, %v754
        %821 = vmatprep.subr.bf16.mxu0 %v772
        %822 = vmatpush1.bf16.msra.mxu0 %v771
        %823 = vmatprep.subr.bf16.mxu0 %v770
        %824 = vmatpush1.bf16.msra.mxu0 %v769
        %825 = vmatprep.subr.bf16.mxu0 %v768
        %826 = vmatpush1.bf16.msra.mxu0 %v767
        %827 = vmatprep.subr.bf16.mxu0 %v766
        %828 = vmatpush1.bf16.msra.mxu0 %v765
        %829 = vmatprep.subr.bf16.mxu0 %v764
        %830 = vmatpush1.bf16.msra.mxu0 %v763
        %831 = vmatprep.subr.bf16.mxu0 %v762
        %832 = vmatpush1.bf16.msra.mxu0 %v761
        %833 = vmatprep.subr.bf16.mxu0 %v760
        %834 = vmatpush1.bf16.msra.mxu0 %v759
        %835 = vmatprep.subr.bf16.mxu0 %v758
        %836 = vmatpush1.bf16.msra.mxu0 %v757
        %837 = vmatprep.subr.bf16.mxu0 %v788
        %838 = vmatpush2.bf16.msra.mxu0 %v787
        %839 = vmatprep.subr.bf16.mxu0 %v786
        %840 = vmatpush2.bf16.msra.mxu0 %v785
        %841 = vmatprep.subr.bf16.mxu0 %v784
        %842 = vmatpush2.bf16.msra.mxu0 %v783
        %843 = vmatprep.subr.bf16.mxu0 %v782
        %844 = vmatpush2.bf16.msra.mxu0 %v781
        %845 = vmatprep.subr.bf16.mxu0 %v780
        %846 = vmatpush2.bf16.msra.mxu0 %v779
        %847 = vmatprep.subr.bf16.mxu0 %v778
        %848 = vmatpush2.bf16.msra.mxu0 %v777
        %849 = vmatprep.subr.bf16.mxu0 %v776
        %850 = vmatpush2.bf16.msra.mxu0 %v775
        %851 = vmatprep.subr.bf16.mxu0 %v774
        %852 = vmatpush2.bf16.msra.mxu0 %v773
        %853 = vmatprep.mubr.bf16.mxu0 %v628
        %854 = vmatmul.mubr.bf16.gmra.mxu0 %v627
        %v855 = vpop.f32.mrf.mxu0
        %v856 = vadd.f32 0.0, %v855
        %v857 = vpop.f32.mrf.mxu0
        %v858 = vadd.f32 0.0, %v857
        %v859 = vpop.f32.mrf.mxu0
        %v860 = vpop.f32.mrf.mxu0
        %861 = vdwg.mxu0
        %v862 = vld [vmem:[%s394] sm:$0x3]
        %v863 = vld [vmem:[%s398] sm:$0x3]
        %v864 = vsel %vm545, %v856, 0.0
        %v865 = vrot.slane %v864, 4
        %v866 = vadd.f32 %v864, %v865
        %v867 = vrot.slane %v866, 2
        %v868 = vadd.f32 %v866, %v867
        %v869 = vrot.slane %v868, 1
        %v870 = vadd.f32 %v868, %v869
        %v871 = vsel %vm545, %v858, 0.0
        %v872 = vrot.slane %v871, 4
        %v873 = vadd.f32 %v871, %v872
        %v874 = vrot.slane %v873, 2
        %v875 = vadd.f32 %v873, %v874
        %v876 = vrot.slane %v875, 1
        %v877 = vadd.f32 %v875, %v876
        %v878 = vmul.f32 %v870, %v560
        %v879 = vmul.f32 %v877, %v560
        %v880 = vmul.f32 %v856, %v856
        %v881 = vmul.f32 %v858, %v858
        %v882 = vsel %vm545, %v880, 0.0
        %v883 = vrot.slane %v882, 4
        %v884 = vadd.f32 %v882, %v883
        %v885 = vrot.slane %v884, 2
        %v886 = vadd.f32 %v884, %v885
        %v887 = vrot.slane %v886, 1
        %v888 = vadd.f32 %v886, %v887
        %v889 = vsel %vm545, %v881, 0.0
        %v890 = vrot.slane %v889, 4
        %v891 = vadd.f32 %v889, %v890
        %v892 = vrot.slane %v891, 2
        %v893 = vadd.f32 %v891, %v892
        %v894 = vrot.slane %v893, 1
        %v895 = vadd.f32 %v893, %v894
        %v896 = vmul.f32 %v888, %v560
        %v897 = vmul.f32 %v895, %v560
        %v898 = vmul.f32 %v878, %v878
        %v899 = vmul.f32 %v879, %v879
        %v900 = vsub.f32 %v896, %v898
        %v901 = vsub.f32 %v897, %v899
        %v902 = vmax.f32 %v900, 0.0
        %v903 = vmax.f32 %v901, 0.0
        %v904 = vsub.f32 %v856, %v878
        %v905 = vsub.f32 %v858, %v879
        %v906 = vadd.f32 %v902, 1e-05
        %v907 = vadd.f32 %v903, 1e-05
        %v908 = vrsqrt.pop %v906
        %v909 = vrsqrt.pop %v907
        %v910 = vmul.f32 %v904, %v908
        %v911 = vmul.f32 %v905, %v909
        %v913 = vlaneseq
        %v914 = vshrl.u32 %v913, 7
        %v915 = vsub.s32 0, %v914
        %v916 = vrot.slane %v862, %v915
        %v917 = vlaneseq
        %v918 = vshrl.u32 %v917, 7
        %v919 = vsub.s32 1, %v918
        %v920 = vrot.slane %v862, %v919
        %v923 = vmul.f32 %v910, %v916
        %v924 = vmul.f32 %v911, %v920
        %v926 = vlaneseq
        %v927 = vshrl.u32 %v926, 7
        %v928 = vsub.s32 0, %v927
        %v929 = vrot.slane %v863, %v928
        %v930 = vlaneseq
        %v931 = vshrl.u32 %v930, 7
        %v932 = vsub.s32 1, %v931
        %v933 = vrot.slane %v863, %v932
        %v936 = vadd.f32 %v923, %v929
        %v937 = vadd.f32 %v924, %v933
        %vm938 = vcmp.gt.f32.partialorder %v936, 0.0
        %vm939 = vcmp.gt.f32.partialorder %v937, 0.0
        %v940 = vmul.f32 %v936, 0.01
        %v941 = vmul.f32 %v937, 0.01
        %v942 = vsel %vm938, %v936, %v940
        %v943 = vsel %vm939, %v937, %v941
        %v944 = vpack.c.bf16 %v942, %v942
        %v945 = vpack.c.bf16 %v943, %v943
        %s946 = scalar_lea.vmem %s318, 256 [#allocation2]
        %v947 = vld [vmem:[%s946] sm:$0xff]
        %v948 = vld [vmem:[%s946 + $0x8] sm:$0xff]
        %v949 = vld [vmem:[%s946 + $0x10] sm:$0xff]
        %v950 = vld [vmem:[%s946 + $0x18] sm:$0xff]
        %v951 = vld [vmem:[%s946 + $0x20] sm:$0xff]
        %v952 = vld [vmem:[%s946 + $0x28] sm:$0xff]
        %v953 = vld [vmem:[%s946 + $0x30] sm:$0xff]
        %v954 = vld [vmem:[%s946 + $0x38] sm:$0xff]
        %v955 = vld [vmem:[%s946 + $0x40] sm:$0xff]
        %v956 = vld [vmem:[%s946 + $0x48] sm:$0xff]
        %v957 = vld [vmem:[%s946 + $0x50] sm:$0xff]
        %v958 = vld [vmem:[%s946 + $0x58] sm:$0xff]
        %v959 = vld [vmem:[%s946 + $0x60] sm:$0xff]
        %v960 = vld [vmem:[%s946 + $0x68] sm:$0xff]
        %v961 = vld [vmem:[%s946 + $0x70] sm:$0xff]
        %v962 = vld [vmem:[%s946 + $0x78] sm:$0xff]
        %v963 = vld [vmem:[%s946 + $0x80] sm:$0xff]
        %v964 = vld [vmem:[%s946 + $0x88] sm:$0xff]
        %v965 = vld [vmem:[%s946 + $0x90] sm:$0xff]
        %v966 = vld [vmem:[%s946 + $0x98] sm:$0xff]
        %v967 = vld [vmem:[%s946 + $0xa0] sm:$0xff]
        %v968 = vld [vmem:[%s946 + $0xa8] sm:$0xff]
        %v969 = vld [vmem:[%s946 + $0xb0] sm:$0xff]
        %v970 = vld [vmem:[%s946 + $0xb8] sm:$0xff]
        %v971 = vld [vmem:[%s946 + $0xc0] sm:$0xff]
        %v972 = vld [vmem:[%s946 + $0xc8] sm:$0xff]
        %v973 = vld [vmem:[%s946 + $0xd0] sm:$0xff]
        %v974 = vld [vmem:[%s946 + $0xd8] sm:$0xff]
        %v975 = vld [vmem:[%s946 + $0xe0] sm:$0xff]
        %v976 = vld [vmem:[%s946 + $0xe8] sm:$0xff]
        %v977 = vld [vmem:[%s946 + $0xf0] sm:$0xff]
        %v978 = vld [vmem:[%s946 + $0xf8] sm:$0xff]
        %v1011 = vunpack.c.l.b16 %v947
        %v1012 = vunpack.c.h.b16 %v947
        %v1013 = vunpack.c.l.b16 %v948
        %v1014 = vunpack.c.h.b16 %v948
        %v1015 = vunpack.c.l.b16 %v949
        %v1016 = vunpack.c.h.b16 %v949
        %v1017 = vunpack.c.l.b16 %v950
        %v1018 = vunpack.c.h.b16 %v950
        %v1019 = vunpack.c.l.b16 %v951
        %v1020 = vunpack.c.h.b16 %v951
        %v1021 = vunpack.c.l.b16 %v952
        %v1022 = vunpack.c.h.b16 %v952
        %v1023 = vunpack.c.l.b16 %v953
        %v1024 = vunpack.c.h.b16 %v953
        %v1025 = vunpack.c.l.b16 %v954
        %v1026 = vunpack.c.h.b16 %v954
        %v1027 = vunpack.c.l.b16 %v955
        %v1028 = vunpack.c.h.b16 %v955
        %v1029 = vunpack.c.l.b16 %v956
        %v1030 = vunpack.c.h.b16 %v956
        %v1031 = vunpack.c.l.b16 %v957
        %v1032 = vunpack.c.h.b16 %v957
        %v1033 = vunpack.c.l.b16 %v958
        %v1034 = vunpack.c.h.b16 %v958
        %v1035 = vunpack.c.l.b16 %v959
        %v1036 = vunpack.c.h.b16 %v959
        %v1037 = vunpack.c.l.b16 %v960
        %v1038 = vunpack.c.h.b16 %v960
        %v1039 = vunpack.c.l.b16 %v961
        %v1040 = vunpack.c.h.b16 %v961
        %v1041 = vunpack.c.l.b16 %v962
        %v1042 = vunpack.c.h.b16 %v962
        %v1043 = vunpack.c.l.b16 %v963
        %v1044 = vunpack.c.h.b16 %v963
        %v1045 = vunpack.c.l.b16 %v964
        %v1046 = vunpack.c.h.b16 %v964
        %v1047 = vunpack.c.l.b16 %v965
        %v1048 = vunpack.c.h.b16 %v965
        %v1049 = vunpack.c.l.b16 %v966
        %v1050 = vunpack.c.h.b16 %v966
        %v1051 = vunpack.c.l.b16 %v967
        %v1052 = vunpack.c.h.b16 %v967
        %v1053 = vunpack.c.l.b16 %v968
        %v1054 = vunpack.c.h.b16 %v968
        %v1055 = vunpack.c.l.b16 %v969
        %v1056 = vunpack.c.h.b16 %v969
        %v1057 = vunpack.c.l.b16 %v970
        %v1058 = vunpack.c.h.b16 %v970
        %v1059 = vunpack.c.l.b16 %v971
        %v1060 = vunpack.c.h.b16 %v971
        %v1061 = vunpack.c.l.b16 %v972
        %v1062 = vunpack.c.h.b16 %v972
        %v1063 = vunpack.c.l.b16 %v973
        %v1064 = vunpack.c.h.b16 %v973
        %v1065 = vunpack.c.l.b16 %v974
        %v1066 = vunpack.c.h.b16 %v974
        %v1067 = vunpack.c.l.b16 %v975
        %v1068 = vunpack.c.h.b16 %v975
        %v1069 = vunpack.c.l.b16 %v976
        %v1070 = vunpack.c.h.b16 %v976
        %v1071 = vunpack.c.l.b16 %v977
        %v1072 = vunpack.c.h.b16 %v977
        %v1073 = vunpack.c.l.b16 %v978
        %v1074 = vunpack.c.h.b16 %v978
        %v1075 = vpack.c.b16 %v1013, %v1011
        %v1076 = vpack.c.b16 %v1014, %v1012
        %v1077 = vpack.c.b16 %v1017, %v1015
        %v1078 = vpack.c.b16 %v1018, %v1016
        %v1079 = vpack.c.b16 %v1021, %v1019
        %v1080 = vpack.c.b16 %v1022, %v1020
        %v1081 = vpack.c.b16 %v1025, %v1023
        %v1082 = vpack.c.b16 %v1026, %v1024
        %v1083 = vpack.c.b16 %v1029, %v1027
        %v1084 = vpack.c.b16 %v1030, %v1028
        %v1085 = vpack.c.b16 %v1033, %v1031
        %v1086 = vpack.c.b16 %v1034, %v1032
        %v1087 = vpack.c.b16 %v1037, %v1035
        %v1088 = vpack.c.b16 %v1038, %v1036
        %v1089 = vpack.c.b16 %v1041, %v1039
        %v1090 = vpack.c.b16 %v1042, %v1040
        %v1091 = vpack.c.b16 %v1045, %v1043
        %v1092 = vpack.c.b16 %v1046, %v1044
        %v1093 = vpack.c.b16 %v1049, %v1047
        %v1094 = vpack.c.b16 %v1050, %v1048
        %v1095 = vpack.c.b16 %v1053, %v1051
        %v1096 = vpack.c.b16 %v1054, %v1052
        %v1097 = vpack.c.b16 %v1057, %v1055
        %v1098 = vpack.c.b16 %v1058, %v1056
        %v1099 = vpack.c.b16 %v1061, %v1059
        %v1100 = vpack.c.b16 %v1062, %v1060
        %v1101 = vpack.c.b16 %v1065, %v1063
        %v1102 = vpack.c.b16 %v1066, %v1064
        %v1103 = vpack.c.b16 %v1069, %v1067
        %v1104 = vpack.c.b16 %v1070, %v1068
        %v1105 = vpack.c.b16 %v1073, %v1071
        %v1106 = vpack.c.b16 %v1074, %v1072
        %1139 = vmatprep.subr.bf16.mxu0 %v1090
        %1140 = vmatpush1.bf16.msra.mxu0 %v1089
        %1141 = vmatprep.subr.bf16.mxu0 %v1088
        %1142 = vmatpush1.bf16.msra.mxu0 %v1087
        %1143 = vmatprep.subr.bf16.mxu0 %v1086
        %1144 = vmatpush1.bf16.msra.mxu0 %v1085
        %1145 = vmatprep.subr.bf16.mxu0 %v1084
        %1146 = vmatpush1.bf16.msra.mxu0 %v1083
        %1147 = vmatprep.subr.bf16.mxu0 %v1082
        %1148 = vmatpush1.bf16.msra.mxu0 %v1081
        %1149 = vmatprep.subr.bf16.mxu0 %v1080
        %1150 = vmatpush1.bf16.msra.mxu0 %v1079
        %1151 = vmatprep.subr.bf16.mxu0 %v1078
        %1152 = vmatpush1.bf16.msra.mxu0 %v1077
        %1153 = vmatprep.subr.bf16.mxu0 %v1076
        %1154 = vmatpush1.bf16.msra.mxu0 %v1075
        %1155 = vmatprep.subr.bf16.mxu0 %v1106
        %1156 = vmatpush2.bf16.msra.mxu0 %v1105
        %1157 = vmatprep.subr.bf16.mxu0 %v1104
        %1158 = vmatpush2.bf16.msra.mxu0 %v1103
        %1159 = vmatprep.subr.bf16.mxu0 %v1102
        %1160 = vmatpush2.bf16.msra.mxu0 %v1101
        %1161 = vmatprep.subr.bf16.mxu0 %v1100
        %1162 = vmatpush2.bf16.msra.mxu0 %v1099
        %1163 = vmatprep.subr.bf16.mxu0 %v1098
        %1164 = vmatpush2.bf16.msra.mxu0 %v1097
        %1165 = vmatprep.subr.bf16.mxu0 %v1096
        %1166 = vmatpush2.bf16.msra.mxu0 %v1095
        %1167 = vmatprep.subr.bf16.mxu0 %v1094
        %1168 = vmatpush2.bf16.msra.mxu0 %v1093
        %1169 = vmatprep.subr.bf16.mxu0 %v1092
        %1170 = vmatpush2.bf16.msra.mxu0 %v1091
        %1171 = vmatprep.mubr.bf16.mxu0 %v945
        %1172 = vmatmul.mubr.bf16.gmra.mxu0 %v944
        %v1173 = vpop.f32.mrf.mxu0
        %v1174 = vadd.f32 0.0, %v1173
        %v1175 = vpop.f32.mrf.mxu0
        %v1176 = vadd.f32 0.0, %v1175
        %v1177 = vpop.f32.mrf.mxu0
        %v1178 = vpop.f32.mrf.mxu0
        %1179 = vdwg.mxu0
        %s1180 = scalar_lea.vmem %s394, 2
        %v1181 = vld [vmem:[%s1180] sm:$0x3]
        %s1182 = scalar_lea.vmem %s398, 2
        %v1183 = vld [vmem:[%s1182] sm:$0x3]
        %v1184 = vsel %vm545, %v1174, 0.0
        %v1185 = vrot.slane %v1184, 4
        %v1186 = vadd.f32 %v1184, %v1185
        %v1187 = vrot.slane %v1186, 2
        %v1188 = vadd.f32 %v1186, %v1187
        %v1189 = vrot.slane %v1188, 1
        %v1190 = vadd.f32 %v1188, %v1189
        %v1191 = vsel %vm545, %v1176, 0.0
        %v1192 = vrot.slane %v1191, 4
        %v1193 = vadd.f32 %v1191, %v1192
        %v1194 = vrot.slane %v1193, 2
        %v1195 = vadd.f32 %v1193, %v1194
        %v1196 = vrot.slane %v1195, 1
        %v1197 = vadd.f32 %v1195, %v1196
        %v1198 = vmul.f32 %v1190, %v560
        %v1199 = vmul.f32 %v1197, %v560
        %v1200 = vmul.f32 %v1174, %v1174
        %v1201 = vmul.f32 %v1176, %v1176
        %v1202 = vsel %vm545, %v1200, 0.0
        %v1203 = vrot.slane %v1202, 4
        %v1204 = vadd.f32 %v1202, %v1203
        %v1205 = vrot.slane %v1204, 2
        %v1206 = vadd.f32 %v1204, %v1205
        %v1207 = vrot.slane %v1206, 1
        %v1208 = vadd.f32 %v1206, %v1207
        %v1209 = vsel %vm545, %v1201, 0.0
        %v1210 = vrot.slane %v1209, 4
        %v1211 = vadd.f32 %v1209, %v1210
        %v1212 = vrot.slane %v1211, 2
        %v1213 = vadd.f32 %v1211, %v1212
        %v1214 = vrot.slane %v1213, 1
        %v1215 = vadd.f32 %v1213, %v1214
        %v1216 = vmul.f32 %v1208, %v560
        %v1217 = vmul.f32 %v1215, %v560
        %v1218 = vmul.f32 %v1198, %v1198
        %v1219 = vmul.f32 %v1199, %v1199
        %v1220 = vsub.f32 %v1216, %v1218
        %v1221 = vsub.f32 %v1217, %v1219
        %v1222 = vmax.f32 %v1220, 0.0
        %v1223 = vmax.f32 %v1221, 0.0
        %v1224 = vsub.f32 %v1174, %v1198
        %v1225 = vsub.f32 %v1176, %v1199
        %v1226 = vadd.f32 %v1222, 1e-05
        %v1227 = vadd.f32 %v1223, 1e-05
        %v1228 = vrsqrt.pop %v1226
        %v1229 = vrsqrt.pop %v1227
        %v1230 = vmul.f32 %v1224, %v1228
        %v1231 = vmul.f32 %v1225, %v1229
        %v1233 = vlaneseq
        %v1234 = vshrl.u32 %v1233, 7
        %v1235 = vsub.s32 0, %v1234
        %v1236 = vrot.slane %v1181, %v1235
        %v1237 = vlaneseq
        %v1238 = vshrl.u32 %v1237, 7
        %v1239 = vsub.s32 1, %v1238
        %v1240 = vrot.slane %v1181, %v1239
        %v1243 = vmul.f32 %v1230, %v1236
        %v1244 = vmul.f32 %v1231, %v1240
        %v1246 = vlaneseq
        %v1247 = vshrl.u32 %v1246, 7
        %v1248 = vsub.s32 0, %v1247
        %v1249 = vrot.slane %v1183, %v1248
        %v1250 = vlaneseq
        %v1251 = vshrl.u32 %v1250, 7
        %v1252 = vsub.s32 1, %v1251
        %v1253 = vrot.slane %v1183, %v1252
        %v1256 = vadd.f32 %v1243, %v1249
        %v1257 = vadd.f32 %v1244, %v1253
        %vm1258 = vcmp.gt.f32.partialorder %v1256, 0.0
        %vm1259 = vcmp.gt.f32.partialorder %v1257, 0.0
        %v1260 = vmul.f32 %v1256, 0.01
        %v1261 = vmul.f32 %v1257, 0.01
        %v1262 = vsel %vm1258, %v1256, %v1260
        %v1263 = vsel %vm1259, %v1257, %v1261
        %v1264 = vpack.c.bf16 %v1262, %v1262
        %v1265 = vpack.c.bf16 %v1263, %v1263
        %s1266 = scalar_lea.vmem %s318, 512 [#allocation2]
        %v1267 = vld [vmem:[%s1266] sm:$0xff]
        %v1268 = vld [vmem:[%s1266 + $0x8] sm:$0xff]
        %v1269 = vld [vmem:[%s1266 + $0x10] sm:$0xff]
        %v1270 = vld [vmem:[%s1266 + $0x18] sm:$0xff]
        %v1271 = vld [vmem:[%s1266 + $0x20] sm:$0xff]
        %v1272 = vld [vmem:[%s1266 + $0x28] sm:$0xff]
        %v1273 = vld [vmem:[%s1266 + $0x30] sm:$0xff]
        %v1274 = vld [vmem:[%s1266 + $0x38] sm:$0xff]
        %v1275 = vld [vmem:[%s1266 + $0x40] sm:$0xff]
        %v1276 = vld [vmem:[%s1266 + $0x48] sm:$0xff]
        %v1277 = vld [vmem:[%s1266 + $0x50] sm:$0xff]
        %v1278 = vld [vmem:[%s1266 + $0x58] sm:$0xff]
        %v1279 = vld [vmem:[%s1266 + $0x60] sm:$0xff]
        %v1280 = vld [vmem:[%s1266 + $0x68] sm:$0xff]
        %v1281 = vld [vmem:[%s1266 + $0x70] sm:$0xff]
        %v1282 = vld [vmem:[%s1266 + $0x78] sm:$0xff]
        %v1283 = vld [vmem:[%s1266 + $0x80] sm:$0xff]
        %v1284 = vld [vmem:[%s1266 + $0x88] sm:$0xff]
        %v1285 = vld [vmem:[%s1266 + $0x90] sm:$0xff]
        %v1286 = vld [vmem:[%s1266 + $0x98] sm:$0xff]
        %v1287 = vld [vmem:[%s1266 + $0xa0] sm:$0xff]
        %v1288 = vld [vmem:[%s1266 + $0xa8] sm:$0xff]
        %v1289 = vld [vmem:[%s1266 + $0xb0] sm:$0xff]
        %v1290 = vld [vmem:[%s1266 + $0xb8] sm:$0xff]
        %v1291 = vld [vmem:[%s1266 + $0xc0] sm:$0xff]
        %v1292 = vld [vmem:[%s1266 + $0xc8] sm:$0xff]
        %v1293 = vld [vmem:[%s1266 + $0xd0] sm:$0xff]
        %v1294 = vld [vmem:[%s1266 + $0xd8] sm:$0xff]
        %v1295 = vld [vmem:[%s1266 + $0xe0] sm:$0xff]
        %v1296 = vld [vmem:[%s1266 + $0xe8] sm:$0xff]
        %v1297 = vld [vmem:[%s1266 + $0xf0] sm:$0xff]
        %v1298 = vld [vmem:[%s1266 + $0xf8] sm:$0xff]
        %v1331 = vunpack.c.l.b16 %v1267
        %v1332 = vunpack.c.h.b16 %v1267
        %v1333 = vunpack.c.l.b16 %v1268
        %v1334 = vunpack.c.h.b16 %v1268
        %v1335 = vunpack.c.l.b16 %v1269
        %v1336 = vunpack.c.h.b16 %v1269
        %v1337 = vunpack.c.l.b16 %v1270
        %v1338 = vunpack.c.h.b16 %v1270
        %v1339 = vunpack.c.l.b16 %v1271
        %v1340 = vunpack.c.h.b16 %v1271
        %v1341 = vunpack.c.l.b16 %v1272
        %v1342 = vunpack.c.h.b16 %v1272
        %v1343 = vunpack.c.l.b16 %v1273
        %v1344 = vunpack.c.h.b16 %v1273
        %v1345 = vunpack.c.l.b16 %v1274
        %v1346 = vunpack.c.h.b16 %v1274
        %v1347 = vunpack.c.l.b16 %v1275
        %v1348 = vunpack.c.h.b16 %v1275
        %v1349 = vunpack.c.l.b16 %v1276
        %v1350 = vunpack.c.h.b16 %v1276
        %v1351 = vunpack.c.l.b16 %v1277
        %v1352 = vunpack.c.h.b16 %v1277
        %v1353 = vunpack.c.l.b16 %v1278
        %v1354 = vunpack.c.h.b16 %v1278
        %v1355 = vunpack.c.l.b16 %v1279
        %v1356 = vunpack.c.h.b16 %v1279
        %v1357 = vunpack.c.l.b16 %v1280
        %v1358 = vunpack.c.h.b16 %v1280
        %v1359 = vunpack.c.l.b16 %v1281
        %v1360 = vunpack.c.h.b16 %v1281
        %v1361 = vunpack.c.l.b16 %v1282
        %v1362 = vunpack.c.h.b16 %v1282
        %v1363 = vunpack.c.l.b16 %v1283
        %v1364 = vunpack.c.h.b16 %v1283
        %v1365 = vunpack.c.l.b16 %v1284
        %v1366 = vunpack.c.h.b16 %v1284
        %v1367 = vunpack.c.l.b16 %v1285
        %v1368 = vunpack.c.h.b16 %v1285
        %v1369 = vunpack.c.l.b16 %v1286
        %v1370 = vunpack.c.h.b16 %v1286
        %v1371 = vunpack.c.l.b16 %v1287
        %v1372 = vunpack.c.h.b16 %v1287
        %v1373 = vunpack.c.l.b16 %v1288
        %v1374 = vunpack.c.h.b16 %v1288
        %v1375 = vunpack.c.l.b16 %v1289
        %v1376 = vunpack.c.h.b16 %v1289
        %v1377 = vunpack.c.l.b16 %v1290
        %v1378 = vunpack.c.h.b16 %v1290
        %v1379 = vunpack.c.l.b16 %v1291
        %v1380 = vunpack.c.h.b16 %v1291
        %v1381 = vunpack.c.l.b16 %v1292
        %v1382 = vunpack.c.h.b16 %v1292
        %v1383 = vunpack.c.l.b16 %v1293
        %v1384 = vunpack.c.h.b16 %v1293
        %v1385 = vunpack.c.l.b16 %v1294
        %v1386 = vunpack.c.h.b16 %v1294
        %v1387 = vunpack.c.l.b16 %v1295
        %v1388 = vunpack.c.h.b16 %v1295
        %v1389 = vunpack.c.l.b16 %v1296
        %v1390 = vunpack.c.h.b16 %v1296
        %v1391 = vunpack.c.l.b16 %v1297
        %v1392 = vunpack.c.h.b16 %v1297
        %v1393 = vunpack.c.l.b16 %v1298
        %v1394 = vunpack.c.h.b16 %v1298
        %v1395 = vpack.c.b16 %v1333, %v1331
        %v1396 = vpack.c.b16 %v1334, %v1332
        %v1397 = vpack.c.b16 %v1337, %v1335
        %v1398 = vpack.c.b16 %v1338, %v1336
        %v1399 = vpack.c.b16 %v1341, %v1339
        %v1400 = vpack.c.b16 %v1342, %v1340
        %v1401 = vpack.c.b16 %v1345, %v1343
        %v1402 = vpack.c.b16 %v1346, %v1344
        %v1403 = vpack.c.b16 %v1349, %v1347
        %v1404 = vpack.c.b16 %v1350, %v1348
        %v1405 = vpack.c.b16 %v1353, %v1351
        %v1406 = vpack.c.b16 %v1354, %v1352
        %v1407 = vpack.c.b16 %v1357, %v1355
        %v1408 = vpack.c.b16 %v1358, %v1356
        %v1409 = vpack.c.b16 %v1361, %v1359
        %v1410 = vpack.c.b16 %v1362, %v1360
        %v1411 = vpack.c.b16 %v1365, %v1363
        %v1412 = vpack.c.b16 %v1366, %v1364
        %v1413 = vpack.c.b16 %v1369, %v1367
        %v1414 = vpack.c.b16 %v1370, %v1368
        %v1415 = vpack.c.b16 %v1373, %v1371
        %v1416 = vpack.c.b16 %v1374, %v1372
        %v1417 = vpack.c.b16 %v1377, %v1375
        %v1418 = vpack.c.b16 %v1378, %v1376
        %v1419 = vpack.c.b16 %v1381, %v1379
        %v1420 = vpack.c.b16 %v1382, %v1380
        %v1421 = vpack.c.b16 %v1385, %v1383
        %v1422 = vpack.c.b16 %v1386, %v1384
        %v1423 = vpack.c.b16 %v1389, %v1387
        %v1424 = vpack.c.b16 %v1390, %v1388
        %v1425 = vpack.c.b16 %v1393, %v1391
        %v1426 = vpack.c.b16 %v1394, %v1392
        %1459 = vmatprep.subr.bf16.mxu0 %v1410
        %1460 = vmatpush1.bf16.msra.mxu0 %v1409
        %1461 = vmatprep.subr.bf16.mxu0 %v1408
        %1462 = vmatpush1.bf16.msra.mxu0 %v1407
        %1463 = vmatprep.subr.bf16.mxu0 %v1406
        %1464 = vmatpush1.bf16.msra.mxu0 %v1405
        %1465 = vmatprep.subr.bf16.mxu0 %v1404
        %1466 = vmatpush1.bf16.msra.mxu0 %v1403
        %1467 = vmatprep.subr.bf16.mxu0 %v1402
        %1468 = vmatpush1.bf16.msra.mxu0 %v1401
        %1469 = vmatprep.subr.bf16.mxu0 %v1400
        %1470 = vmatpush1.bf16.msra.mxu0 %v1399
        %1471 = vmatprep.subr.bf16.mxu0 %v1398
        %1472 = vmatpush1.bf16.msra.mxu0 %v1397
        %1473 = vmatprep.subr.bf16.mxu0 %v1396
        %1474 = vmatpush1.bf16.msra.mxu0 %v1395
        %1475 = vmatprep.subr.bf16.mxu0 %v1426
        %1476 = vmatpush2.bf16.msra.mxu0 %v1425
        %1477 = vmatprep.subr.bf16.mxu0 %v1424
        %1478 = vmatpush2.bf16.msra.mxu0 %v1423
        %1479 = vmatprep.subr.bf16.mxu0 %v1422
        %1480 = vmatpush2.bf16.msra.mxu0 %v1421
        %1481 = vmatprep.subr.bf16.mxu0 %v1420
        %1482 = vmatpush2.bf16.msra.mxu0 %v1419
        %1483 = vmatprep.subr.bf16.mxu0 %v1418
        %1484 = vmatpush2.bf16.msra.mxu0 %v1417
        %1485 = vmatprep.subr.bf16.mxu0 %v1416
        %1486 = vmatpush2.bf16.msra.mxu0 %v1415
        %1487 = vmatprep.subr.bf16.mxu0 %v1414
        %1488 = vmatpush2.bf16.msra.mxu0 %v1413
        %1489 = vmatprep.subr.bf16.mxu0 %v1412
        %1490 = vmatpush2.bf16.msra.mxu0 %v1411
        %1491 = vmatprep.mubr.bf16.mxu0 %v1265
        %1492 = vmatmul.mubr.bf16.gmra.mxu0 %v1264
        %v1493 = vpop.f32.mrf.mxu0
        %v1494 = vadd.f32 0.0, %v1493
        %v1495 = vpop.f32.mrf.mxu0
        %v1496 = vadd.f32 0.0, %v1495
        %v1497 = vpop.f32.mrf.mxu0
        %v1498 = vpop.f32.mrf.mxu0
        %1499 = vdwg.mxu0
        %s1500 = scalar_lea.vmem %s394, 4
        %v1501 = vld [vmem:[%s1500] sm:$0x3]
        %s1502 = scalar_lea.vmem %s398, 4
        %v1503 = vld [vmem:[%s1502] sm:$0x3]
        %v1504 = vsel %vm545, %v1494, 0.0
        %v1505 = vrot.slane %v1504, 4
        %v1506 = vadd.f32 %v1504, %v1505
        %v1507 = vrot.slane %v1506, 2
        %v1508 = vadd.f32 %v1506, %v1507
        %v1509 = vrot.slane %v1508, 1
        %v1510 = vadd.f32 %v1508, %v1509
        %v1511 = vsel %vm545, %v1496, 0.0
        %v1512 = vrot.slane %v1511, 4
        %v1513 = vadd.f32 %v1511, %v1512
        %v1514 = vrot.slane %v1513, 2
        %v1515 = vadd.f32 %v1513, %v1514
        %v1516 = vrot.slane %v1515, 1
        %v1517 = vadd.f32 %v1515, %v1516
        %v1518 = vmul.f32 %v1510, %v560
        %v1519 = vmul.f32 %v1517, %v560
        %v1520 = vmul.f32 %v1494, %v1494
        %v1521 = vmul.f32 %v1496, %v1496
        %v1522 = vsel %vm545, %v1520, 0.0
        %v1523 = vrot.slane %v1522, 4
        %v1524 = vadd.f32 %v1522, %v1523
        %v1525 = vrot.slane %v1524, 2
        %v1526 = vadd.f32 %v1524, %v1525
        %v1527 = vrot.slane %v1526, 1
        %v1528 = vadd.f32 %v1526, %v1527
        %v1529 = vsel %vm545, %v1521, 0.0
        %v1530 = vrot.slane %v1529, 4
        %v1531 = vadd.f32 %v1529, %v1530
        %v1532 = vrot.slane %v1531, 2
        %v1533 = vadd.f32 %v1531, %v1532
        %v1534 = vrot.slane %v1533, 1
        %v1535 = vadd.f32 %v1533, %v1534
        %v1536 = vmul.f32 %v1528, %v560
        %v1537 = vmul.f32 %v1535, %v560
        %v1538 = vmul.f32 %v1518, %v1518
        %v1539 = vmul.f32 %v1519, %v1519
        %v1540 = vsub.f32 %v1536, %v1538
        %v1541 = vsub.f32 %v1537, %v1539
        %v1542 = vmax.f32 %v1540, 0.0
        %v1543 = vmax.f32 %v1541, 0.0
        %v1544 = vsub.f32 %v1494, %v1518
        %v1545 = vsub.f32 %v1496, %v1519
        %v1546 = vadd.f32 %v1542, 1e-05
        %v1547 = vadd.f32 %v1543, 1e-05
        %v1548 = vrsqrt.pop %v1546
        %v1549 = vrsqrt.pop %v1547
        %v1550 = vmul.f32 %v1544, %v1548
        %v1551 = vmul.f32 %v1545, %v1549
        %v1553 = vlaneseq
        %v1554 = vshrl.u32 %v1553, 7
        %v1555 = vsub.s32 0, %v1554
        %v1556 = vrot.slane %v1501, %v1555
        %v1557 = vlaneseq
        %v1558 = vshrl.u32 %v1557, 7
        %v1559 = vsub.s32 1, %v1558
        %v1560 = vrot.slane %v1501, %v1559
        %v1563 = vmul.f32 %v1550, %v1556
        %v1564 = vmul.f32 %v1551, %v1560
        %v1566 = vlaneseq
        %v1567 = vshrl.u32 %v1566, 7
        %v1568 = vsub.s32 0, %v1567
        %v1569 = vrot.slane %v1503, %v1568
        %v1570 = vlaneseq
        %v1571 = vshrl.u32 %v1570, 7
        %v1572 = vsub.s32 1, %v1571
        %v1573 = vrot.slane %v1503, %v1572
        %v1576 = vadd.f32 %v1563, %v1569
        %v1577 = vadd.f32 %v1564, %v1573
        %vm1578 = vcmp.gt.f32.partialorder %v1576, 0.0
        %vm1579 = vcmp.gt.f32.partialorder %v1577, 0.0
        %v1580 = vmul.f32 %v1576, 0.01
        %v1581 = vmul.f32 %v1577, 0.01
        %v1582 = vsel %vm1578, %v1576, %v1580
        %v1583 = vsel %vm1579, %v1577, %v1581
        %v1584 = vpack.c.bf16 %v1582, %v1582
        %v1585 = vpack.c.bf16 %v1583, %v1583
        %s1586 = scalar_lea.vmem %s318, 768 [#allocation2]
        %v1587 = vld [vmem:[%s1586] sm:$0xff]
        %v1588 = vld [vmem:[%s1586 + $0x8] sm:$0xff]
        %v1589 = vld [vmem:[%s1586 + $0x10] sm:$0xff]
        %v1590 = vld [vmem:[%s1586 + $0x18] sm:$0xff]
        %v1591 = vld [vmem:[%s1586 + $0x20] sm:$0xff]
        %v1592 = vld [vmem:[%s1586 + $0x28] sm:$0xff]
        %v1593 = vld [vmem:[%s1586 + $0x30] sm:$0xff]
        %v1594 = vld [vmem:[%s1586 + $0x38] sm:$0xff]
        %v1595 = vld [vmem:[%s1586 + $0x40] sm:$0xff]
        %v1596 = vld [vmem:[%s1586 + $0x48] sm:$0xff]
        %v1597 = vld [vmem:[%s1586 + $0x50] sm:$0xff]
        %v1598 = vld [vmem:[%s1586 + $0x58] sm:$0xff]
        %v1599 = vld [vmem:[%s1586 + $0x60] sm:$0xff]
        %v1600 = vld [vmem:[%s1586 + $0x68] sm:$0xff]
        %v1601 = vld [vmem:[%s1586 + $0x70] sm:$0xff]
        %v1602 = vld [vmem:[%s1586 + $0x78] sm:$0xff]
        %v1603 = vld [vmem:[%s1586 + $0x80] sm:$0xff]
        %v1604 = vld [vmem:[%s1586 + $0x88] sm:$0xff]
        %v1605 = vld [vmem:[%s1586 + $0x90] sm:$0xff]
        %v1606 = vld [vmem:[%s1586 + $0x98] sm:$0xff]
        %v1607 = vld [vmem:[%s1586 + $0xa0] sm:$0xff]
        %v1608 = vld [vmem:[%s1586 + $0xa8] sm:$0xff]
        %v1609 = vld [vmem:[%s1586 + $0xb0] sm:$0xff]
        %v1610 = vld [vmem:[%s1586 + $0xb8] sm:$0xff]
        %v1611 = vld [vmem:[%s1586 + $0xc0] sm:$0xff]
        %v1612 = vld [vmem:[%s1586 + $0xc8] sm:$0xff]
        %v1613 = vld [vmem:[%s1586 + $0xd0] sm:$0xff]
        %v1614 = vld [vmem:[%s1586 + $0xd8] sm:$0xff]
        %v1615 = vld [vmem:[%s1586 + $0xe0] sm:$0xff]
        %v1616 = vld [vmem:[%s1586 + $0xe8] sm:$0xff]
        %v1617 = vld [vmem:[%s1586 + $0xf0] sm:$0xff]
        %v1618 = vld [vmem:[%s1586 + $0xf8] sm:$0xff]
        %v1651 = vunpack.c.l.b16 %v1587
        %v1652 = vunpack.c.h.b16 %v1587
        %v1653 = vunpack.c.l.b16 %v1588
        %v1654 = vunpack.c.h.b16 %v1588
        %v1655 = vunpack.c.l.b16 %v1589
        %v1656 = vunpack.c.h.b16 %v1589
        %v1657 = vunpack.c.l.b16 %v1590
        %v1658 = vunpack.c.h.b16 %v1590
        %v1659 = vunpack.c.l.b16 %v1591
        %v1660 = vunpack.c.h.b16 %v1591
        %v1661 = vunpack.c.l.b16 %v1592
        %v1662 = vunpack.c.h.b16 %v1592
        %v1663 = vunpack.c.l.b16 %v1593
        %v1664 = vunpack.c.h.b16 %v1593
        %v1665 = vunpack.c.l.b16 %v1594
        %v1666 = vunpack.c.h.b16 %v1594
        %v1667 = vunpack.c.l.b16 %v1595
        %v1668 = vunpack.c.h.b16 %v1595
        %v1669 = vunpack.c.l.b16 %v1596
        %v1670 = vunpack.c.h.b16 %v1596
        %v1671 = vunpack.c.l.b16 %v1597
        %v1672 = vunpack.c.h.b16 %v1597
        %v1673 = vunpack.c.l.b16 %v1598
        %v1674 = vunpack.c.h.b16 %v1598
        %v1675 = vunpack.c.l.b16 %v1599
        %v1676 = vunpack.c.h.b16 %v1599
        %v1677 = vunpack.c.l.b16 %v1600
        %v1678 = vunpack.c.h.b16 %v1600
        %v1679 = vunpack.c.l.b16 %v1601
        %v1680 = vunpack.c.h.b16 %v1601
        %v1681 = vunpack.c.l.b16 %v1602
        %v1682 = vunpack.c.h.b16 %v1602
        %v1683 = vunpack.c.l.b16 %v1603
        %v1684 = vunpack.c.h.b16 %v1603
        %v1685 = vunpack.c.l.b16 %v1604
        %v1686 = vunpack.c.h.b16 %v1604
        %v1687 = vunpack.c.l.b16 %v1605
        %v1688 = vunpack.c.h.b16 %v1605
        %v1689 = vunpack.c.l.b16 %v1606
        %v1690 = vunpack.c.h.b16 %v1606
        %v1691 = vunpack.c.l.b16 %v1607
        %v1692 = vunpack.c.h.b16 %v1607
        %v1693 = vunpack.c.l.b16 %v1608
        %v1694 = vunpack.c.h.b16 %v1608
        %v1695 = vunpack.c.l.b16 %v1609
        %v1696 = vunpack.c.h.b16 %v1609
        %v1697 = vunpack.c.l.b16 %v1610
        %v1698 = vunpack.c.h.b16 %v1610
        %v1699 = vunpack.c.l.b16 %v1611
        %v1700 = vunpack.c.h.b16 %v1611
        %v1701 = vunpack.c.l.b16 %v1612
        %v1702 = vunpack.c.h.b16 %v1612
        %v1703 = vunpack.c.l.b16 %v1613
        %v1704 = vunpack.c.h.b16 %v1613
        %v1705 = vunpack.c.l.b16 %v1614
        %v1706 = vunpack.c.h.b16 %v1614
        %v1707 = vunpack.c.l.b16 %v1615
        %v1708 = vunpack.c.h.b16 %v1615
        %v1709 = vunpack.c.l.b16 %v1616
        %v1710 = vunpack.c.h.b16 %v1616
        %v1711 = vunpack.c.l.b16 %v1617
        %v1712 = vunpack.c.h.b16 %v1617
        %v1713 = vunpack.c.l.b16 %v1618
        %v1714 = vunpack.c.h.b16 %v1618
        %v1715 = vpack.c.b16 %v1653, %v1651
        %v1716 = vpack.c.b16 %v1654, %v1652
        %v1717 = vpack.c.b16 %v1657, %v1655
        %v1718 = vpack.c.b16 %v1658, %v1656
        %v1719 = vpack.c.b16 %v1661, %v1659
        %v1720 = vpack.c.b16 %v1662, %v1660
        %v1721 = vpack.c.b16 %v1665, %v1663
        %v1722 = vpack.c.b16 %v1666, %v1664
        %v1723 = vpack.c.b16 %v1669, %v1667
        %v1724 = vpack.c.b16 %v1670, %v1668
        %v1725 = vpack.c.b16 %v1673, %v1671
        %v1726 = vpack.c.b16 %v1674, %v1672
        %v1727 = vpack.c.b16 %v1677, %v1675
        %v1728 = vpack.c.b16 %v1678, %v1676
        %v1729 = vpack.c.b16 %v1681, %v1679
        %v1730 = vpack.c.b16 %v1682, %v1680
        %v1731 = vpack.c.b16 %v1685, %v1683
        %v1732 = vpack.c.b16 %v1686, %v1684
        %v1733 = vpack.c.b16 %v1689, %v1687
        %v1734 = vpack.c.b16 %v1690, %v1688
        %v1735 = vpack.c.b16 %v1693, %v1691
        %v1736 = vpack.c.b16 %v1694, %v1692
        %v1737 = vpack.c.b16 %v1697, %v1695
        %v1738 = vpack.c.b16 %v1698, %v1696
        %v1739 = vpack.c.b16 %v1701, %v1699
        %v1740 = vpack.c.b16 %v1702, %v1700
        %v1741 = vpack.c.b16 %v1705, %v1703
        %v1742 = vpack.c.b16 %v1706, %v1704
        %v1743 = vpack.c.b16 %v1709, %v1707
        %v1744 = vpack.c.b16 %v1710, %v1708
        %v1745 = vpack.c.b16 %v1713, %v1711
        %v1746 = vpack.c.b16 %v1714, %v1712
        %1779 = vmatprep.subr.bf16.mxu0 %v1730
        %1780 = vmatpush1.bf16.msra.mxu0 %v1729
        %1781 = vmatprep.subr.bf16.mxu0 %v1728
        %1782 = vmatpush1.bf16.msra.mxu0 %v1727
        %1783 = vmatprep.subr.bf16.mxu0 %v1726
        %1784 = vmatpush1.bf16.msra.mxu0 %v1725
        %1785 = vmatprep.subr.bf16.mxu0 %v1724
        %1786 = vmatpush1.bf16.msra.mxu0 %v1723
        %1787 = vmatprep.subr.bf16.mxu0 %v1722
        %1788 = vmatpush1.bf16.msra.mxu0 %v1721
        %1789 = vmatprep.subr.bf16.mxu0 %v1720
        %1790 = vmatpush1.bf16.msra.mxu0 %v1719
        %1791 = vmatprep.subr.bf16.mxu0 %v1718
        %1792 = vmatpush1.bf16.msra.mxu0 %v1717
        %1793 = vmatprep.subr.bf16.mxu0 %v1716
        %1794 = vmatpush1.bf16.msra.mxu0 %v1715
        %1795 = vmatprep.subr.bf16.mxu0 %v1746
        %1796 = vmatpush2.bf16.msra.mxu0 %v1745
        %1797 = vmatprep.subr.bf16.mxu0 %v1744
        %1798 = vmatpush2.bf16.msra.mxu0 %v1743
        %1799 = vmatprep.subr.bf16.mxu0 %v1742
        %1800 = vmatpush2.bf16.msra.mxu0 %v1741
        %1801 = vmatprep.subr.bf16.mxu0 %v1740
        %1802 = vmatpush2.bf16.msra.mxu0 %v1739
        %1803 = vmatprep.subr.bf16.mxu0 %v1738
        %1804 = vmatpush2.bf16.msra.mxu0 %v1737
        %1805 = vmatprep.subr.bf16.mxu0 %v1736
        %1806 = vmatpush2.bf16.msra.mxu0 %v1735
        %1807 = vmatprep.subr.bf16.mxu0 %v1734
        %1808 = vmatpush2.bf16.msra.mxu0 %v1733
        %1809 = vmatprep.subr.bf16.mxu0 %v1732
        %1810 = vmatpush2.bf16.msra.mxu0 %v1731
        %1811 = vmatprep.mubr.bf16.mxu0 %v1585
        %1812 = vmatmul.mubr.bf16.gmra.mxu0 %v1584
        %v1813 = vpop.f32.mrf.mxu0
        %v1814 = vadd.f32 0.0, %v1813
        %v1815 = vpop.f32.mrf.mxu0
        %v1816 = vadd.f32 0.0, %v1815
        %v1817 = vpop.f32.mrf.mxu0
        %v1818 = vpop.f32.mrf.mxu0
        %1819 = vdwg.mxu0
        %s1820 = scalar_lea.vmem %s394, 6
        %v1821 = vld [vmem:[%s1820] sm:$0x3]
        %s1822 = scalar_lea.vmem %s398, 6
        %v1823 = vld [vmem:[%s1822] sm:$0x3]
        %v1824 = vsel %vm545, %v1814, 0.0
        %v1825 = vrot.slane %v1824, 4
        %v1826 = vadd.f32 %v1824, %v1825
        %v1827 = vrot.slane %v1826, 2
        %v1828 = vadd.f32 %v1826, %v1827
        %v1829 = vrot.slane %v1828, 1
        %v1830 = vadd.f32 %v1828, %v1829
        %v1831 = vsel %vm545, %v1816, 0.0
        %v1832 = vrot.slane %v1831, 4
        %v1833 = vadd.f32 %v1831, %v1832
        %v1834 = vrot.slane %v1833, 2
        %v1835 = vadd.f32 %v1833, %v1834
        %v1836 = vrot.slane %v1835, 1
        %v1837 = vadd.f32 %v1835, %v1836
        %v1838 = vmul.f32 %v1830, %v560
        %v1839 = vmul.f32 %v1837, %v560
        %v1840 = vmul.f32 %v1814, %v1814
        %v1841 = vmul.f32 %v1816, %v1816
        %v1842 = vsel %vm545, %v1840, 0.0
        %v1843 = vrot.slane %v1842, 4
        %v1844 = vadd.f32 %v1842, %v1843
        %v1845 = vrot.slane %v1844, 2
        %v1846 = vadd.f32 %v1844, %v1845
        %v1847 = vrot.slane %v1846, 1
        %v1848 = vadd.f32 %v1846, %v1847
        %v1849 = vsel %vm545, %v1841, 0.0
        %v1850 = vrot.slane %v1849, 4
        %v1851 = vadd.f32 %v1849, %v1850
        %v1852 = vrot.slane %v1851, 2
        %v1853 = vadd.f32 %v1851, %v1852
        %v1854 = vrot.slane %v1853, 1
        %v1855 = vadd.f32 %v1853, %v1854
        %v1856 = vmul.f32 %v1848, %v560
        %v1857 = vmul.f32 %v1855, %v560
        %v1858 = vmul.f32 %v1838, %v1838
        %v1859 = vmul.f32 %v1839, %v1839
        %v1860 = vsub.f32 %v1856, %v1858
        %v1861 = vsub.f32 %v1857, %v1859
        %v1862 = vmax.f32 %v1860, 0.0
        %v1863 = vmax.f32 %v1861, 0.0
        %v1864 = vsub.f32 %v1814, %v1838
        %v1865 = vsub.f32 %v1816, %v1839
        %v1866 = vadd.f32 %v1862, 1e-05
        %v1867 = vadd.f32 %v1863, 1e-05
        %v1868 = vrsqrt.pop %v1866
        %v1869 = vrsqrt.pop %v1867
        %v1870 = vmul.f32 %v1864, %v1868
        %v1871 = vmul.f32 %v1865, %v1869
        %v1873 = vlaneseq
        %v1874 = vshrl.u32 %v1873, 7
        %v1875 = vsub.s32 0, %v1874
        %v1876 = vrot.slane %v1821, %v1875
        %v1877 = vlaneseq
        %v1878 = vshrl.u32 %v1877, 7
        %v1879 = vsub.s32 1, %v1878
        %v1880 = vrot.slane %v1821, %v1879
        %v1883 = vmul.f32 %v1870, %v1876
        %v1884 = vmul.f32 %v1871, %v1880
        %v1886 = vlaneseq
        %v1887 = vshrl.u32 %v1886, 7
        %v1888 = vsub.s32 0, %v1887
        %v1889 = vrot.slane %v1823, %v1888
        %v1890 = vlaneseq
        %v1891 = vshrl.u32 %v1890, 7
        %v1892 = vsub.s32 1, %v1891
        %v1893 = vrot.slane %v1823, %v1892
        %v1896 = vadd.f32 %v1883, %v1889
        %v1897 = vadd.f32 %v1884, %v1893
        %vm1898 = vcmp.gt.f32.partialorder %v1896, 0.0
        %vm1899 = vcmp.gt.f32.partialorder %v1897, 0.0
        %v1900 = vmul.f32 %v1896, 0.01
        %v1901 = vmul.f32 %v1897, 0.01
        %v1902 = vsel %vm1898, %v1896, %v1900
        %v1903 = vsel %vm1899, %v1897, %v1901
        %v1906 = vcombine.low %v1902, %v1903
        %1908 = vst [vmem:[%s403] sm:$0xff] %v1906
        %p1909 = scmp.lt.s32.totalorder %s21, 1
        %s1910 = scalar_select %p1909, %s21, 1
        %s1911 = smul.addr %s1910, 2
        %s1912 = smul.addr %s1911, 4
        %s1913 = scalar_lea.vmem %s7, %s1912
        // Predicated region
        $region53: #{rt_generator_forward.3} parent=47 // pred_check
          %p1914 = pneg %p221
        $region54: #{rt_generator_forward.3} parent=47 // pred_check_branch
          %1916 = sbr.rel (%p1914) target = $region56
        $region55: #{rt_generator_forward.3} parent=47 // pred_region
          _
        $region56: #{rt_generator_forward.3} parent=47 // pred_fallthru
          _
      $region48: #{rt_generator_forward.3} parent=5 // pred_fallthru
        _
      %p1917 = scmp.le.s32.totalorder 2, %s16
      // Predicated region
      $region57: #{rt_generator_forward.3} parent=5 // pred_check
        %p1918 = pneg %p1917
      $region58: #{rt_generator_forward.3} parent=5 // pred_check_branch
        %1920 = sbr.rel (%p1918) target = $region60
      $region59: #{rt_generator_forward.3} parent=5 // pred_region
        %s1921 = ssub.s32 %s16, 2
        // Predicated region
        $region61: #{rt_generator_forward.3} parent=59 // pred_check
          %p1922 = pneg %p227
        $region62: #{rt_generator_forward.3} parent=59 // pred_check_branch
          %1924 = sbr.rel (%p1922) target = $region64
        $region63: #{rt_generator_forward.3} parent=59 // pred_region
          %p1925 = scmp.lt.s32.totalorder %s22, 1
          %s1926 = scalar_select %p1925, %s22, 1
          %s1927 = smul.addr %s1926, 2
          %s1928 = smul.addr %s1927, 4
          %s1929 = scalar_lea.vmem %s7, %s1928
        $region64: #{rt_generator_forward.3} parent=59 // pred_fallthru
          _
      $region60: #{rt_generator_forward.3} parent=5 // pred_fallthru
        _
    $region6: #{rt_generator_forward.3} parent=1 // loop_footer
      %s20 = sadd.s32 1, %s16
    $region7: #{rt_generator_forward.3} parent=1 // loop_footer_branch
      %15 = sbr.rel target = $region3
    $region8: #{rt_generator_forward.3} parent=1 // loop_exit
      _
    %1930 = vsyncpa [#allocation3], 1
    %s1931 = scalar_lea.sflag [#allocation3], 1
    %1932 = vsyncpa %s1931, 1

</llo_original>
